<compile_context>
chip_gen: v6e
topology: v6e:2x2x1
jax: 0.10.0
libtpu: 0.0.40
codegen_flags: <defaults>
</compile_context>

<pallas_src>
import functools

import jax
import jax.numpy as jnp
from jax import lax
from jax.experimental import pallas as pl
from jax.experimental.pallas import tpu as pltpu

FOCAL_GAMMA = 2.0          # statically 2 -> focal uses x*x, never jnp.power
CLASS_LOSS_SCALE = 4.0
COORD_LOSS_SCALE = 0.1
BG_WEIGHT = 0.1
LOGIT_REG_FACTOR = 0.0


def _focal(lp):
    # -lp * clamp(1 - exp(lp), 0)^2   (used only by the pure-JAX reference)
    t = jnp.maximum(1.0 - jnp.exp(lp), 0.0)
    return -lp * (t * t)


def _loss_kernel(cls_ref, corr_ref, tcorr_ref, bg_ref, fg_ref, out_ref,
                 acc_ref, *, n_valid, has_pad):
    i = pl.program_id(1)

    @pl.when(i == 0)
    def _():
        acc_ref[...] = jnp.zeros_like(acc_ref)

    cls = cls_ref[...].astype(jnp.float32)       # (T, C, HW)
    corr = corr_ref[...].astype(jnp.float32)     # (T, K, HW)
    tcorr = tcorr_ref[...].astype(jnp.float32)   # (T, K, HW)
    bg = bg_ref[...]                             # (T, HW) int
    fg = fg_ref[...]                             # (T, HW) int
    tile_rows, num_classes, hw = cls.shape

    # One fused pass over the class axis: softmax normalizer Z, exp(z)
    # gathered at the bg/fg targets (negative targets keep 0 == exp(-inf)),
    # and the first-max argmax.  No (T, C, HW) log-prob tensor is built.
    m = jnp.max(cls, axis=1)                     # (T, HW), XLU sublane reduce
    sum_e = jnp.zeros((tile_rows, hw), jnp.float32)
    e_bg = jnp.zeros((tile_rows, hw), jnp.float32)
    e_fg = jnp.zeros((tile_rows, hw), jnp.float32)
    best_i = jnp.full((tile_rows, hw), num_classes, jnp.int32)
    for c in range(num_classes):
        zc = cls[:, c, :] - m
        ec = jnp.exp(zc)
        sum_e = sum_e + ec
        e_bg = jnp.where(bg == c, ec, e_bg)
        e_fg = jnp.where(fg == c, ec, e_fg)
        # first max wins (zc == 0 exactly at the running maximum)
        best_i = jnp.minimum(
            best_i, jnp.where(zc == 0.0, jnp.int32(c), jnp.int32(num_classes)))

    inv_z = pl.reciprocal(sum_e, approx=False)
    p_fg = e_fg * inv_z
    p_allowed = (e_bg + e_fg) * inv_z            # == exp(logsumexp(lp_bg, lp_fg))

    # focal(log p) = -log(p) * clamp(1 - p, 0)^2   (gamma == 2)
    t_a = jnp.maximum(1.0 - p_allowed, 0.0)
    cls_w = jnp.where(fg > 0, 1.0, BG_WEIGHT)
    class_loss_map = -jnp.log(p_allowed) * (t_a * t_a) * cls_w

    mask = (bg >= 0) & (fg >= 0)
    p_bg_safe = jnp.where(mask, e_bg * inv_z, 1.0)   # focal(log 1) == 0
    t_b = jnp.maximum(1.0 - p_bg_safe, 0.0)
    strict_map = -jnp.log(p_bg_safe) * (t_b * t_b)

    unanimous = (bg < 0) & (fg > 0)
    unan_f = unanimous.astype(jnp.float32)
    diff = corr - tcorr
    coord_sq = jnp.sum(diff * diff, axis=1)          # (T, HW)
    coord_w = jnp.maximum(p_fg, unan_f)

    recall_map = jnp.where(unanimous & (best_i == fg), 1.0, 0.0)
    fpr_map = ((best_i != 0) & (best_i != fg)).astype(jnp.float32)

    if has_pad:  # statically present only when B*A was padded up
        row0 = (pl.program_id(0) * pl.num_programs(1) + i) * tile_rows
        rows = row0 + lax.broadcasted_iota(jnp.int32, (tile_rows, hw), 0)
        valid = (rows < n_valid).astype(jnp.float32)
        class_loss_map = class_loss_map * valid
        strict_map = strict_map * valid
        coord_w = coord_w * valid
        recall_map = recall_map * valid
        unan_f = unan_f * valid
        fpr_map = fpr_map * valid

    coord_map = coord_sq * coord_w

    # Per-pixel running sums (pure VPU adds); the cross-lane reductions run
    # only once per core in the final step below.
    acc_ref[0] += class_loss_map
    acc_ref[1] += strict_map
    acc_ref[2] += coord_map
    acc_ref[3] += coord_w
    acc_ref[4] += recall_map
    acc_ref[5] += unan_f
    acc_ref[6] += fpr_map
    # LOGIT_REG_FACTOR == 0.0 -> logit-regularization sum is statically dead.

    @pl.when(i == pl.num_programs(1) - 1)
    def _():
        for s in range(7):
            total = jnp.sum(acc_ref[s])
            out_ref[0:1, s:s + 1, :] = jnp.full((1, 1, 128), total, jnp.float32)
        out_ref[0:1, 7:8, :] = jnp.zeros((1, 1, 128), jnp.float32)


def _round_up(x, m):
    return (x + m - 1) // m * m


def _vmem_plan():
    # Generation-aware VMEM budget: v5e/v6e have 128 MiB physical VMEM,
    # v7x-class chips 64 MiB per TensorCore.
    try:
        cap = int(pltpu.get_tpu_info().vmem_capacity_bytes)
    except Exception:
        cap = 64 * 1024 * 1024
    if cap >= 100 * 1024 * 1024:
        return 32 * 1024 * 1024, 80 * 1024 * 1024    # block budget, vmem limit
    return 20 * 1024 * 1024, 48 * 1024 * 1024


def loss_head_forward(class_map, correction_map, target_class_map,
                      target_correction_map, stats, stat_prefix):
    B, A = target_class_map.shape[:2]
    H, W = class_map.shape[-2:]
    C = class_map.shape[1] // A
    K = correction_map.shape[1] // A
    N = B * A
    HW = H * W

    # Lane-dense layout; keep producer dtypes (kernel widens on load) and
    # split bg/fg into separate (N, HW) arrays.
    cls = class_map.reshape(N, C, HW)
    corr = correction_map.reshape(N, K, HW)
    tcorr = target_correction_map.reshape(N, K, HW)
    tcls = target_class_map
    if (not jnp.issubdtype(tcls.dtype, jnp.integer)) or tcls.dtype.itemsize > 4:
        tcls = tcls.astype(jnp.int32)
    tcls = tcls.reshape(N, 2, HW)
    bg = tcls[:, 0, :]
    fg = tcls[:, 1, :]

    block_budget, vmem_limit = _vmem_plan()
    per_row = HW * (2 * (C * cls.dtype.itemsize
                         + K * corr.dtype.itemsize
                         + K * tcorr.dtype.itemsize
                         + 2 * bg.dtype.itemsize)
                    + 7 * 4)                      # + f32 accumulator maps
    T = max(8, (block_budget // max(per_row, 1)) // 8 * 8)
    T = min(T, _round_up(N, 8))

    n_pad = _round_up(N, T)
    n_blocks = n_pad // T
    if n_blocks >= 2:
        # 2-way split of the block axis so megacore parts (v7x/v4/v5p) run
        # both TensorCores; a no-op (just serial) on single-core chips.
        if n_blocks % 2:
            n_blocks += 1
            n_pad = n_blocks * T
        nc = 2
    else:
        nc = 1
    ksteps = n_blocks // nc

    def pad_rows(x):
        if n_pad == N:
            return x
        widths = [(0, n_pad - N)] + [(0, 0)] * (x.ndim - 1)
        return jnp.pad(x, widths)

    cls, corr, tcorr, bg, fg = (pad_rows(a) for a in (cls, corr, tcorr, bg, fg))

    kernel = functools.partial(_loss_kernel, n_valid=N, has_pad=(n_pad != N))
    row_map3 = lambda c, i: (c * ksteps + i, 0, 0)
    row_map2 = lambda c, i: (c * ksteps + i, 0)

    partials = pl.pallas_call(
        kernel,
        out_shape=jax.ShapeDtypeStruct((nc, 8, 128), jnp.float32),
        grid_spec=pltpu.PrefetchScalarGridSpec(
            num_scalar_prefetch=0,
            grid=(nc, ksteps),
            in_specs=[
                pl.BlockSpec((T, C, HW), row_map3),
                pl.BlockSpec((T, K, HW), row_map3),
                pl.BlockSpec((T, K, HW), row_map3),
                pl.BlockSpec((T, HW), row_map2),
                pl.BlockSpec((T, HW), row_map2),
            ],
            out_specs=pl.BlockSpec((1, 8, 128), lambda c, i: (c, 0, 0)),
            scratch_shapes=[pltpu.VMEM((7, T, HW), jnp.float32)],
        ),
        compiler_params=pltpu.CompilerParams(
            dimension_semantics=("parallel", "arbitrary"),
            vmem_limit_bytes=vmem_limit,
        ),
    )(cls, corr, tcorr, bg, fg)

    sums = jnp.sum(partials[:, :, 0], axis=0)        # (8,)
    (class_loss, strict_loss, coord_loss, coord_w_sum,
     recall_sum, recall_cnt, fpr_sum, sq_sum) = (sums[s] for s in range(8))

    stats[stat_prefix + '-RECALL    '] = (recall_sum, recall_cnt)
    stats[stat_prefix + '-FPR       '] = (fpr_sum, recall_cnt)
    stats[stat_prefix + '-COORD-ERR '] = (coord_loss, coord_w_sum)
    stats[stat_prefix + '-cls-loss  '] = (class_loss, 1)
    stats[stat_prefix + '-cls-strict'] = (strict_loss, 1)
    stats[stat_prefix + '-loc-loss  '] = (coord_loss, 1)

    logit_reg = sq_sum / float(class_map.size)
    return ((class_loss + strict_loss * 0.02) * CLASS_LOSS_SCALE
            + coord_loss * COORD_LOSS_SCALE
            + logit_reg * LOGIT_REG_FACTOR)


def reference_loss(class_map, correction_map, target_class_map, target_correction_map):
    cm = class_map.astype(jnp.float32)
    corr = correction_map.astype(jnp.float32)
    B, A = target_class_map.shape[:2]
    H, W = cm.shape[-2:]
    C = cm.shape[1] // A
    K = corr.shape[1] // A
    cm = cm.reshape(B, A, C, H, W)
    corr = corr.reshape(B, A, K, H, W)
    tcls = target_class_map.astype(jnp.int32)
    bg, fg = tcls[:, :, 0], tcls[:, :, 1]
    logp = jax.nn.log_softmax(cm, axis=2)
    padded = jnp.concatenate(
        [jnp.full((B, A, 1, H, W), -jnp.inf, jnp.float32), logp], axis=2)
    gathered = jnp.take_along_axis(padded, tcls + 1, axis=2)
    lp_bg, lp_fg = gathered[:, :, 0], gathered[:, :, 1]
    allowed = jax.scipy.special.logsumexp(gathered, axis=2)
    w = jnp.where(fg > 0, 1.0, BG_WEIGHT)
    class_loss = jnp.sum(_focal(allowed) * w)
    mask = (bg >= 0) & (fg >= 0)
    strict_loss = jnp.sum(_focal(jnp.where(mask, lp_bg, 0.0)))
    unanimous = (bg < 0) & (fg > 0)
    coord_sq = jnp.sum((corr - target_correction_map.astype(jnp.float32)) ** 2, axis=2)
    cw = jnp.maximum(jnp.exp(lp_fg), unanimous.astype(jnp.float32))
    coord_loss = jnp.sum(coord_sq * cw)
    return ((class_loss + strict_loss * 0.02) * CLASS_LOSS_SCALE
            + coord_loss * COORD_LOSS_SCALE
            + jnp.mean(cm ** 2) * LOGIT_REG_FACTOR)


if __name__ == "__main__":
    B, A, C, K, H, W = 2, 2, 3, 4, 16, 16
    key = jax.random.PRNGKey(0)
    k1, k2, k3, k4, k5 = jax.random.split(key, 5)

    class_map = jax.random.normal(k1, (B, A * C, H, W), jnp.float32)
    correction_map = jax.random.normal(k2, (B, A * K, H, W), jnp.float32)
    target_correction_map = jax.random.normal(k3, (B, A, K, H, W), jnp.float32)

    fg = jax.random.randint(k4, (B, A, H, W), -1, C)        # {-1, 0, 1, 2}
    bg = jax.random.randint(k5, (B, A, H, W), -1, 1)         # {-1, 0}
    bg = jnp.where(fg < 0, 0, bg)                             # never both negative
    target_class_map = jnp.stack([bg, fg], axis=2).astype(jnp.int32)

    stats = {}
    total = loss_head_forward(class_map, correction_map, target_class_map,
                              target_correction_map, stats, "val")
    total = jax.block_until_ready(total)

    ref = jax.block_until_ready(
        reference_loss(class_map, correction_map, target_class_map,
                       target_correction_map))

    err = abs(float(total) - float(ref))
    tol = 1e-3 + 1e-4 * abs(float(ref))
    assert err <= tol, f"mismatch: pallas={float(total)} ref={float(ref)} err={err}"
    print("KERNEL_OK")
</pallas_src>

<mosaic_0001>
module attributes {stable_mosaic.version = 11 : i64} {
  func.func @_loss_kernel(%arg0: i32, %arg1: i32, %arg2: memref<8x3x256xf32, #tpu.memory_space<vmem>>, %arg3: memref<8x4x256xf32, #tpu.memory_space<vmem>>, %arg4: memref<8x4x256xf32, #tpu.memory_space<vmem>>, %arg5: memref<8x256xi32, #tpu.memory_space<vmem>>, %arg6: memref<8x256xi32, #tpu.memory_space<vmem>>, %arg7: memref<1x8x128xf32, #tpu.memory_space<vmem>>, %arg8: memref<7x8x256xf32, #tpu.memory_space<vmem>>) attributes {dimension_semantics = [#tpu.dimension_semantics<parallel>, #tpu.dimension_semantics<arbitrary>], iteration_bounds = array<i64: 1, 1>, scalar_prefetch = 0 : i64, scratch_operands = 1 : i64, tpu.core_type = #tpu.core_type<tc>, window_params = [{transform_indices = @transform_0, window_bounds = array<i64: 8, 3, 256>}, {transform_indices = @transform_1, window_bounds = array<i64: 8, 4, 256>}, {transform_indices = @transform_2, window_bounds = array<i64: 8, 4, 256>}, {transform_indices = @transform_3, window_bounds = array<i64: 8, 256>}, {transform_indices = @transform_4, window_bounds = array<i64: 8, 256>}, {transform_indices = @transform_5, window_bounds = array<i64: 1, 8, 128>}]} {
    %c0_i32 = arith.constant 0 : i32
    %0 = arith.cmpi eq, %arg1, %c0_i32 : i32
    %1 = arith.extui %0 : i1 to i32
    %c0_i32_0 = arith.constant 0 : i32
    %2 = arith.cmpi ne, %1, %c0_i32_0 : i32
    scf.if %2 {
      %cst_86 = arith.constant 0.000000e+00 : f32
      %184 = vector.broadcast %cst_86 : f32 to vector<7x8x256xf32>
      %c0_87 = arith.constant 0 : index
      %c0_88 = arith.constant 0 : index
      %c0_89 = arith.constant 0 : index
      %185 = vector.load %arg8[%c0_87, %c0_88, %c0_89] : memref<7x8x256xf32, #tpu.memory_space<vmem>>, vector<7x8x256xf32>
      tpu.vector_store %arg8[%c0_87, %c0_88, %c0_89], %184 {strides = array<i32>} : memref<7x8x256xf32, #tpu.memory_space<vmem>>, vector<7x8x256xf32>,
    } else {
    }
    %c0 = arith.constant 0 : index
    %c0_1 = arith.constant 0 : index
    %c0_2 = arith.constant 0 : index
    %3 = vector.load %arg2[%c0, %c0_1, %c0_2] : memref<8x3x256xf32, #tpu.memory_space<vmem>>, vector<8x3x256xf32>
    %c0_3 = arith.constant 0 : index
    %c0_4 = arith.constant 0 : index
    %c0_5 = arith.constant 0 : index
    %4 = vector.load %arg3[%c0_3, %c0_4, %c0_5] : memref<8x4x256xf32, #tpu.memory_space<vmem>>, vector<8x4x256xf32>
    %c0_6 = arith.constant 0 : index
    %c0_7 = arith.constant 0 : index
    %c0_8 = arith.constant 0 : index
    %5 = vector.load %arg4[%c0_6, %c0_7, %c0_8] : memref<8x4x256xf32, #tpu.memory_space<vmem>>, vector<8x4x256xf32>
    %c0_9 = arith.constant 0 : index
    %c0_10 = arith.constant 0 : index
    %6 = vector.load %arg5[%c0_9, %c0_10] : memref<8x256xi32, #tpu.memory_space<vmem>>, vector<8x256xi32>
    %c0_11 = arith.constant 0 : index
    %c0_12 = arith.constant 0 : index
    %7 = vector.load %arg6[%c0_11, %c0_12] : memref<8x256xi32, #tpu.memory_space<vmem>>, vector<8x256xi32>
    %cst = arith.constant dense<0xFF800000> : vector<8x256xf32>
    %8 = vector.multi_reduction <maximumf>, %3, %cst [1] : vector<8x3x256xf32> to vector<8x256xf32>
    %cst_13 = arith.constant 0.000000e+00 : f32
    %9 = vector.broadcast %cst_13 : f32 to vector<8x256xf32>
    %cst_14 = arith.constant 0.000000e+00 : f32
    %10 = vector.broadcast %cst_14 : f32 to vector<8x256xf32>
    %cst_15 = arith.constant 0.000000e+00 : f32
    %11 = vector.broadcast %cst_15 : f32 to vector<8x256xf32>
    %c3_i32 = arith.constant 3 : i32
    %12 = vector.broadcast %c3_i32 : i32 to vector<8x256xi32>
    %13 = vector.extract_strided_slice %3 {offsets = [0, 0, 0], sizes = [8, 1, 256], strides = [1, 1, 1]} : vector<8x3x256xf32> to vector<8x1x256xf32>
    %14 = vector.shape_cast %13 : vector<8x1x256xf32> to vector<8x256xf32>
    %15 = arith.subf %14, %8 : vector<8x256xf32>
    %16 = math.exp %15 : vector<8x256xf32>
    %17 = arith.addf %9, %16 : vector<8x256xf32>
    %c0_i32_16 = arith.constant 0 : i32
    %18 = vector.broadcast %c0_i32_16 : i32 to vector<8x256xi32>
    %19 = arith.cmpi eq, %6, %18 : vector<8x256xi32>
    %20 = arith.select %19, %16, %10 : vector<8x256xi1>, vector<8x256xf32>
    %c0_i32_17 = arith.constant 0 : i32
    %21 = vector.broadcast %c0_i32_17 : i32 to vector<8x256xi32>
    %22 = arith.cmpi eq, %7, %21 : vector<8x256xi32>
    %23 = arith.select %22, %16, %11 : vector<8x256xi1>, vector<8x256xf32>
    %cst_18 = arith.constant 0.000000e+00 : f32
    %24 = vector.broadcast %cst_18 : f32 to vector<8x256xf32>
    %25 = arith.cmpf oeq, %15, %24 : vector<8x256xf32>
    %c0_i32_19 = arith.constant 0 : i32
    %c3_i32_20 = arith.constant 3 : i32
    %26 = vector.broadcast %c0_i32_19 : i32 to vector<8x256xi32>
    %27 = vector.broadcast %c3_i32_20 : i32 to vector<8x256xi32>
    %28 = arith.select %25, %26, %27 : vector<8x256xi1>, vector<8x256xi32>
    %29 = arith.minsi %12, %28 : vector<8x256xi32>
    %30 = vector.extract_strided_slice %3 {offsets = [0, 1, 0], sizes = [8, 1, 256], strides = [1, 1, 1]} : vector<8x3x256xf32> to vector<8x1x256xf32>
    %31 = vector.shape_cast %30 : vector<8x1x256xf32> to vector<8x256xf32>
    %32 = arith.subf %31, %8 : vector<8x256xf32>
    %33 = math.exp %32 : vector<8x256xf32>
    %34 = arith.addf %17, %33 : vector<8x256xf32>
    %c1_i32 = arith.constant 1 : i32
    %35 = vector.broadcast %c1_i32 : i32 to vector<8x256xi32>
    %36 = arith.cmpi eq, %6, %35 : vector<8x256xi32>
    %37 = arith.select %36, %33, %20 : vector<8x256xi1>, vector<8x256xf32>
    %c1_i32_21 = arith.constant 1 : i32
    %38 = vector.broadcast %c1_i32_21 : i32 to vector<8x256xi32>
    %39 = arith.cmpi eq, %7, %38 : vector<8x256xi32>
    %40 = arith.select %39, %33, %23 : vector<8x256xi1>, vector<8x256xf32>
    %cst_22 = arith.constant 0.000000e+00 : f32
    %41 = vector.broadcast %cst_22 : f32 to vector<8x256xf32>
    %42 = arith.cmpf oeq, %32, %41 : vector<8x256xf32>
    %c1_i32_23 = arith.constant 1 : i32
    %c3_i32_24 = arith.constant 3 : i32
    %43 = vector.broadcast %c1_i32_23 : i32 to vector<8x256xi32>
    %44 = vector.broadcast %c3_i32_24 : i32 to vector<8x256xi32>
    %45 = arith.select %42, %43, %44 : vector<8x256xi1>, vector<8x256xi32>
    %46 = arith.minsi %29, %45 : vector<8x256xi32>
    %47 = vector.extract_strided_slice %3 {offsets = [0, 2, 0], sizes = [8, 1, 256], strides = [1, 1, 1]} : vector<8x3x256xf32> to vector<8x1x256xf32>
    %48 = vector.shape_cast %47 : vector<8x1x256xf32> to vector<8x256xf32>
    %49 = arith.subf %48, %8 : vector<8x256xf32>
    %50 = math.exp %49 : vector<8x256xf32>
    %51 = arith.addf %34, %50 : vector<8x256xf32>
    %c2_i32 = arith.constant 2 : i32
    %52 = vector.broadcast %c2_i32 : i32 to vector<8x256xi32>
    %53 = arith.cmpi eq, %6, %52 : vector<8x256xi32>
    %54 = arith.select %53, %50, %37 : vector<8x256xi1>, vector<8x256xf32>
    %c2_i32_25 = arith.constant 2 : i32
    %55 = vector.broadcast %c2_i32_25 : i32 to vector<8x256xi32>
    %56 = arith.cmpi eq, %7, %55 : vector<8x256xi32>
    %57 = arith.select %56, %50, %40 : vector<8x256xi1>, vector<8x256xf32>
    %cst_26 = arith.constant 0.000000e+00 : f32
    %58 = vector.broadcast %cst_26 : f32 to vector<8x256xf32>
    %59 = arith.cmpf oeq, %49, %58 : vector<8x256xf32>
    %c2_i32_27 = arith.constant 2 : i32
    %c3_i32_28 = arith.constant 3 : i32
    %60 = vector.broadcast %c2_i32_27 : i32 to vector<8x256xi32>
    %61 = vector.broadcast %c3_i32_28 : i32 to vector<8x256xi32>
    %62 = arith.select %59, %60, %61 : vector<8x256xi1>, vector<8x256xi32>
    %63 = arith.minsi %46, %62 : vector<8x256xi32>
    %64 = tpu.reciprocal %51 : vector<8x256xf32> -> vector<8x256xf32>
    %65 = arith.mulf %57, %64 : vector<8x256xf32>
    %66 = arith.addf %54, %57 : vector<8x256xf32>
    %67 = arith.mulf %66, %64 : vector<8x256xf32>
    %cst_29 = arith.constant 1.000000e+00 : f32
    %68 = vector.broadcast %cst_29 : f32 to vector<8x256xf32>
    %69 = arith.subf %68, %67 : vector<8x256xf32>
    %cst_30 = arith.constant 0.000000e+00 : f32
    %70 = vector.broadcast %cst_30 : f32 to vector<8x256xf32>
    %71 = arith.maximumf %69, %70 : vector<8x256xf32>
    %c0_i32_31 = arith.constant 0 : i32
    %72 = vector.broadcast %c0_i32_31 : i32 to vector<8x256xi32>
    %73 = arith.cmpi sgt, %7, %72 : vector<8x256xi32>
    %cst_32 = arith.constant 1.000000e+00 : f32
    %cst_33 = arith.constant 1.000000e-01 : f32
    %74 = vector.broadcast %cst_32 : f32 to vector<8x256xf32>
    %75 = vector.broadcast %cst_33 : f32 to vector<8x256xf32>
    %76 = arith.select %73, %74, %75 : vector<8x256xi1>, vector<8x256xf32>
    %77 = math.log %67 : vector<8x256xf32>
    %cst_34 = arith.constant 0.000000e+00 : f32
    %78 = vector.broadcast %cst_34 : f32 to vector<8x256xf32>
    %79 = arith.subf %78, %77 : vector<8x256xf32>
    %80 = arith.mulf %71, %71 : vector<8x256xf32>
    %81 = arith.mulf %79, %80 : vector<8x256xf32>
    %82 = arith.mulf %81, %76 : vector<8x256xf32>
    %c0_i32_35 = arith.constant 0 : i32
    %83 = vector.broadcast %c0_i32_35 : i32 to vector<8x256xi32>
    %84 = arith.cmpi sge, %6, %83 : vector<8x256xi32>
    %c0_i32_36 = arith.constant 0 : i32
    %85 = vector.broadcast %c0_i32_36 : i32 to vector<8x256xi32>
    %86 = arith.cmpi sge, %7, %85 : vector<8x256xi32>
    %87 = arith.andi %84, %86 : vector<8x256xi1>
    %88 = arith.mulf %54, %64 : vector<8x256xf32>
    %cst_37 = arith.constant 1.000000e+00 : f32
    %89 = vector.broadcast %cst_37 : f32 to vector<8x256xf32>
    %90 = arith.select %87, %88, %89 : vector<8x256xi1>, vector<8x256xf32>
    %cst_38 = arith.constant 1.000000e+00 : f32
    %91 = vector.broadcast %cst_38 : f32 to vector<8x256xf32>
    %92 = arith.subf %91, %90 : vector<8x256xf32>
    %cst_39 = arith.constant 0.000000e+00 : f32
    %93 = vector.broadcast %cst_39 : f32 to vector<8x256xf32>
    %94 = arith.maximumf %92, %93 : vector<8x256xf32>
    %95 = math.log %90 : vector<8x256xf32>
    %cst_40 = arith.constant 0.000000e+00 : f32
    %96 = vector.broadcast %cst_40 : f32 to vector<8x256xf32>
    %97 = arith.subf %96, %95 : vector<8x256xf32>
    %98 = arith.mulf %94, %94 : vector<8x256xf32>
    %99 = arith.mulf %97, %98 : vector<8x256xf32>
    %c0_i32_41 = arith.constant 0 : i32
    %100 = vector.broadcast %c0_i32_41 : i32 to vector<8x256xi32>
    %101 = arith.cmpi slt, %6, %100 : vector<8x256xi32>
    %c0_i32_42 = arith.constant 0 : i32
    %102 = vector.broadcast %c0_i32_42 : i32 to vector<8x256xi32>
    %103 = arith.cmpi sgt, %7, %102 : vector<8x256xi32>
    %104 = arith.andi %101, %103 : vector<8x256xi1>
    %105 = arith.extui %104 : vector<8x256xi1> to vector<8x256xi32>
    %106 = arith.sitofp %105 : vector<8x256xi32> to vector<8x256xf32>
    %107 = arith.subf %4, %5 : vector<8x4x256xf32>
    %108 = arith.mulf %107, %107 : vector<8x4x256xf32>
    %cst_43 = arith.constant dense<0.000000e+00> : vector<8x256xf32>
    %109 = vector.multi_reduction <add>, %108, %cst_43 [1] : vector<8x4x256xf32> to vector<8x256xf32>
    %110 = arith.maximumf %65, %106 : vector<8x256xf32>
    %111 = arith.cmpi eq, %63, %7 : vector<8x256xi32>
    %112 = arith.andi %104, %111 : vector<8x256xi1>
    %cst_44 = arith.constant 1.000000e+00 : f32
    %cst_45 = arith.constant 0.000000e+00 : f32
    %113 = vector.broadcast %cst_44 : f32 to vector<8x256xf32>
    %114 = vector.broadcast %cst_45 : f32 to vector<8x256xf32>
    %115 = arith.select %112, %113, %114 : vector<8x256xi1>, vector<8x256xf32>
    %c0_i32_46 = arith.constant 0 : i32
    %116 = vector.broadcast %c0_i32_46 : i32 to vector<8x256xi32>
    %117 = arith.cmpi ne, %63, %116 : vector<8x256xi32>
    %118 = arith.cmpi ne, %63, %7 : vector<8x256xi32>
    %119 = arith.andi %117, %118 : vector<8x256xi1>
    %120 = arith.extui %119 : vector<8x256xi1> to vector<8x256xi32>
    %121 = arith.sitofp %120 : vector<8x256xi32> to vector<8x256xf32>
    %c1_i32_47 = arith.constant 1 : i32
    %122 = arith.muli %arg0, %c1_i32_47 : i32
    %123 = arith.addi %122, %arg1 : i32
    %c8_i32 = arith.constant 8 : i32
    %124 = arith.muli %123, %c8_i32 : i32
    %125 = tpu.iota {dimensions = array<i32: 0>} : vector<8x256xi32>
    %126 = vector.broadcast %124 : i32 to vector<8x256xi32>
    %127 = arith.addi %126, %125 : vector<8x256xi32>
    %c4_i32 = arith.constant 4 : i32
    %128 = vector.broadcast %c4_i32 : i32 to vector<8x256xi32>
    %129 = arith.cmpi slt, %127, %128 : vector<8x256xi32>
    %130 = arith.extui %129 : vector<8x256xi1> to vector<8x256xi32>
    %131 = arith.sitofp %130 : vector<8x256xi32> to vector<8x256xf32>
    %132 = arith.mulf %82, %131 : vector<8x256xf32>
    %133 = arith.mulf %99, %131 : vector<8x256xf32>
    %134 = arith.mulf %110, %131 : vector<8x256xf32>
    %135 = arith.mulf %115, %131 : vector<8x256xf32>
    %136 = arith.mulf %106, %131 : vector<8x256xf32>
    %137 = arith.mulf %121, %131 : vector<8x256xf32>
    %138 = arith.mulf %109, %134 : vector<8x256xf32>
    %c0_48 = arith.constant 0 : index
    %c0_49 = arith.constant 0 : index
    %c0_50 = arith.constant 0 : index
    %139 = vector.load %arg8[%c0_48, %c0_49, %c0_50] : memref<7x8x256xf32, #tpu.memory_space<vmem>>, vector<1x8x256xf32>
    %140 = vector.shape_cast %139 : vector<1x8x256xf32> to vector<8x256xf32>
    %141 = arith.addf %140, %132 : vector<8x256xf32>
    %c0_51 = arith.constant 0 : index
    %c0_52 = arith.constant 0 : index
    %c0_53 = arith.constant 0 : index
    %142 = vector.load %arg8[%c0_51, %c0_52, %c0_53] : memref<7x8x256xf32, #tpu.memory_space<vmem>>, vector<1x8x256xf32>
    %143 = vector.shape_cast %142 : vector<1x8x256xf32> to vector<8x256xf32>
    %144 = vector.shape_cast %141 : vector<8x256xf32> to vector<1x8x256xf32>
    tpu.vector_store %arg8[%c0_51, %c0_52, %c0_53], %144 {strides = array<i32>} : memref<7x8x256xf32, #tpu.memory_space<vmem>>, vector<1x8x256xf32>,
    %c1 = arith.constant 1 : index
    %c0_54 = arith.constant 0 : index
    %c0_55 = arith.constant 0 : index
    %145 = vector.load %arg8[%c1, %c0_54, %c0_55] : memref<7x8x256xf32, #tpu.memory_space<vmem>>, vector<1x8x256xf32>
    %146 = vector.shape_cast %145 : vector<1x8x256xf32> to vector<8x256xf32>
    %147 = arith.addf %146, %133 : vector<8x256xf32>
    %c1_56 = arith.constant 1 : index
    %c0_57 = arith.constant 0 : index
    %c0_58 = arith.constant 0 : index
    %148 = vector.load %arg8[%c1_56, %c0_57, %c0_58] : memref<7x8x256xf32, #tpu.memory_space<vmem>>, vector<1x8x256xf32>
    %149 = vector.shape_cast %148 : vector<1x8x256xf32> to vector<8x256xf32>
    %150 = vector.shape_cast %147 : vector<8x256xf32> to vector<1x8x256xf32>
    tpu.vector_store %arg8[%c1_56, %c0_57, %c0_58], %150 {strides = array<i32>} : memref<7x8x256xf32, #tpu.memory_space<vmem>>, vector<1x8x256xf32>,
    %c2 = arith.constant 2 : index
    %c0_59 = arith.constant 0 : index
    %c0_60 = arith.constant 0 : index
    %151 = vector.load %arg8[%c2, %c0_59, %c0_60] : memref<7x8x256xf32, #tpu.memory_space<vmem>>, vector<1x8x256xf32>
    %152 = vector.shape_cast %151 : vector<1x8x256xf32> to vector<8x256xf32>
    %153 = arith.addf %152, %138 : vector<8x256xf32>
    %c2_61 = arith.constant 2 : index
    %c0_62 = arith.constant 0 : index
    %c0_63 = arith.constant 0 : index
    %154 = vector.load %arg8[%c2_61, %c0_62, %c0_63] : memref<7x8x256xf32, #tpu.memory_space<vmem>>, vector<1x8x256xf32>
    %155 = vector.shape_cast %154 : vector<1x8x256xf32> to vector<8x256xf32>
    %156 = vector.shape_cast %153 : vector<8x256xf32> to vector<1x8x256xf32>
    tpu.vector_store %arg8[%c2_61, %c0_62, %c0_63], %156 {strides = array<i32>} : memref<7x8x256xf32, #tpu.memory_space<vmem>>, vector<1x8x256xf32>,
    %c3 = arith.constant 3 : index
    %c0_64 = arith.constant 0 : index
    %c0_65 = arith.constant 0 : index
    %157 = vector.load %arg8[%c3, %c0_64, %c0_65] : memref<7x8x256xf32, #tpu.memory_space<vmem>>, vector<1x8x256xf32>
    %158 = vector.shape_cast %157 : vector<1x8x256xf32> to vector<8x256xf32>
    %159 = arith.addf %158, %134 : vector<8x256xf32>
    %c3_66 = arith.constant 3 : index
    %c0_67 = arith.constant 0 : index
    %c0_68 = arith.constant 0 : index
    %160 = vector.load %arg8[%c3_66, %c0_67, %c0_68] : memref<7x8x256xf32, #tpu.memory_space<vmem>>, vector<1x8x256xf32>
    %161 = vector.shape_cast %160 : vector<1x8x256xf32> to vector<8x256xf32>
    %162 = vector.shape_cast %159 : vector<8x256xf32> to vector<1x8x256xf32>
    tpu.vector_store %arg8[%c3_66, %c0_67, %c0_68], %162 {strides = array<i32>} : memref<7x8x256xf32, #tpu.memory_space<vmem>>, vector<1x8x256xf32>,
    %c4 = arith.constant 4 : index
    %c0_69 = arith.constant 0 : index
    %c0_70 = arith.constant 0 : index
    %163 = vector.load %arg8[%c4, %c0_69, %c0_70] : memref<7x8x256xf32, #tpu.memory_space<vmem>>, vector<1x8x256xf32>
    %164 = vector.shape_cast %163 : vector<1x8x256xf32> to vector<8x256xf32>
    %165 = arith.addf %164, %135 : vector<8x256xf32>
    %c4_71 = arith.constant 4 : index
    %c0_72 = arith.constant 0 : index
    %c0_73 = arith.constant 0 : index
    %166 = vector.load %arg8[%c4_71, %c0_72, %c0_73] : memref<7x8x256xf32, #tpu.memory_space<vmem>>, vector<1x8x256xf32>
    %167 = vector.shape_cast %166 : vector<1x8x256xf32> to vector<8x256xf32>
    %168 = vector.shape_cast %165 : vector<8x256xf32> to vector<1x8x256xf32>
    tpu.vector_store %arg8[%c4_71, %c0_72, %c0_73], %168 {strides = array<i32>} : memref<7x8x256xf32, #tpu.memory_space<vmem>>, vector<1x8x256xf32>,
    %c5 = arith.constant 5 : index
    %c0_74 = arith.constant 0 : index
    %c0_75 = arith.constant 0 : index
    %169 = vector.load %arg8[%c5, %c0_74, %c0_75] : memref<7x8x256xf32, #tpu.memory_space<vmem>>, vector<1x8x256xf32>
    %170 = vector.shape_cast %169 : vector<1x8x256xf32> to vector<8x256xf32>
    %171 = arith.addf %170, %136 : vector<8x256xf32>
    %c5_76 = arith.constant 5 : index
    %c0_77 = arith.constant 0 : index
    %c0_78 = arith.constant 0 : index
    %172 = vector.load %arg8[%c5_76, %c0_77, %c0_78] : memref<7x8x256xf32, #tpu.memory_space<vmem>>, vector<1x8x256xf32>
    %173 = vector.shape_cast %172 : vector<1x8x256xf32> to vector<8x256xf32>
    %174 = vector.shape_cast %171 : vector<8x256xf32> to vector<1x8x256xf32>
    tpu.vector_store %arg8[%c5_76, %c0_77, %c0_78], %174 {strides = array<i32>} : memref<7x8x256xf32, #tpu.memory_space<vmem>>, vector<1x8x256xf32>,
    %c6 = arith.constant 6 : index
    %c0_79 = arith.constant 0 : index
    %c0_80 = arith.constant 0 : index
    %175 = vector.load %arg8[%c6, %c0_79, %c0_80] : memref<7x8x256xf32, #tpu.memory_space<vmem>>, vector<1x8x256xf32>
    %176 = vector.shape_cast %175 : vector<1x8x256xf32> to vector<8x256xf32>
    %177 = arith.addf %176, %137 : vector<8x256xf32>
    %c6_81 = arith.constant 6 : index
    %c0_82 = arith.constant 0 : index
    %c0_83 = arith.constant 0 : index
    %178 = vector.load %arg8[%c6_81, %c0_82, %c0_83] : memref<7x8x256xf32, #tpu.memory_space<vmem>>, vector<1x8x256xf32>
    %179 = vector.shape_cast %178 : vector<1x8x256xf32> to vector<8x256xf32>
    %180 = vector.shape_cast %177 : vector<8x256xf32> to vector<1x8x256xf32>
    tpu.vector_store %arg8[%c6_81, %c0_82, %c0_83], %180 {strides = array<i32>} : memref<7x8x256xf32, #tpu.memory_space<vmem>>, vector<1x8x256xf32>,
    %c0_i32_84 = arith.constant 0 : i32
    %181 = arith.cmpi eq, %arg1, %c0_i32_84 : i32
    %182 = arith.extui %181 : i1 to i32
    %c0_i32_85 = arith.constant 0 : i32
    %183 = arith.cmpi ne, %182, %c0_i32_85 : i32
    scf.if %183 {
      %c0_86 = arith.constant 0 : index
      %c0_87 = arith.constant 0 : index
      %c0_88 = arith.constant 0 : index
      %184 = vector.load %arg8[%c0_86, %c0_87, %c0_88] : memref<7x8x256xf32, #tpu.memory_space<vmem>>, vector<1x8x256xf32>
      %185 = vector.shape_cast %184 : vector<1x8x256xf32> to vector<8x256xf32>
      %186 = vector.shape_cast %185 : vector<8x256xf32> to vector<1x8x256xf32>
      %cst_89 = arith.constant dense<0.000000e+00> : vector<1xf32>
      %187 = vector.multi_reduction <add>, %186, %cst_89 [1, 2] : vector<1x8x256xf32> to vector<1xf32>
      %188 = vector.shape_cast %187 : vector<1xf32> to vector<1x1x1xf32>
      %189 = vector.extract %188[0, 0, 0] : f32 from vector<1x1x1xf32>
      %190 = vector.broadcast %189 : f32 to vector<1x1x128xf32>
      %c0_90 = arith.constant 0 : index
      %c0_91 = arith.constant 0 : index
      %c0_92 = arith.constant 0 : index
      %191 = vector.load %arg7[%c0_90, %c0_91, %c0_92] : memref<1x8x128xf32, #tpu.memory_space<vmem>>, vector<1x1x128xf32>
      tpu.vector_store %arg7[%c0_90, %c0_91, %c0_92], %190 {strides = array<i32>} : memref<1x8x128xf32, #tpu.memory_space<vmem>>, vector<1x1x128xf32>,
      %c1_93 = arith.constant 1 : index
      %c0_94 = arith.constant 0 : index
      %c0_95 = arith.constant 0 : index
      %192 = vector.load %arg8[%c1_93, %c0_94, %c0_95] : memref<7x8x256xf32, #tpu.memory_space<vmem>>, vector<1x8x256xf32>
      %193 = vector.shape_cast %192 : vector<1x8x256xf32> to vector<8x256xf32>
      %194 = vector.shape_cast %193 : vector<8x256xf32> to vector<1x8x256xf32>
      %cst_96 = arith.constant dense<0.000000e+00> : vector<1xf32>
      %195 = vector.multi_reduction <add>, %194, %cst_96 [1, 2] : vector<1x8x256xf32> to vector<1xf32>
      %196 = vector.shape_cast %195 : vector<1xf32> to vector<1x1x1xf32>
      %197 = vector.extract %196[0, 0, 0] : f32 from vector<1x1x1xf32>
      %198 = vector.broadcast %197 : f32 to vector<1x1x128xf32>
      %c0_97 = arith.constant 0 : index
      %c1_98 = arith.constant 1 : index
      %c0_99 = arith.constant 0 : index
      %199 = vector.load %arg7[%c0_97, %c1_98, %c0_99] : memref<1x8x128xf32, #tpu.memory_space<vmem>>, vector<1x1x128xf32>
      tpu.vector_store %arg7[%c0_97, %c1_98, %c0_99], %198 {strides = array<i32>} : memref<1x8x128xf32, #tpu.memory_space<vmem>>, vector<1x1x128xf32>,
      %c2_100 = arith.constant 2 : index
      %c0_101 = arith.constant 0 : index
      %c0_102 = arith.constant 0 : index
      %200 = vector.load %arg8[%c2_100, %c0_101, %c0_102] : memref<7x8x256xf32, #tpu.memory_space<vmem>>, vector<1x8x256xf32>
      %201 = vector.shape_cast %200 : vector<1x8x256xf32> to vector<8x256xf32>
      %202 = vector.shape_cast %201 : vector<8x256xf32> to vector<1x8x256xf32>
      %cst_103 = arith.constant dense<0.000000e+00> : vector<1xf32>
      %203 = vector.multi_reduction <add>, %202, %cst_103 [1, 2] : vector<1x8x256xf32> to vector<1xf32>
      %204 = vector.shape_cast %203 : vector<1xf32> to vector<1x1x1xf32>
      %205 = vector.extract %204[0, 0, 0] : f32 from vector<1x1x1xf32>
      %206 = vector.broadcast %205 : f32 to vector<1x1x128xf32>
      %c0_104 = arith.constant 0 : index
      %c2_105 = arith.constant 2 : index
      %c0_106 = arith.constant 0 : index
      %207 = vector.load %arg7[%c0_104, %c2_105, %c0_106] : memref<1x8x128xf32, #tpu.memory_space<vmem>>, vector<1x1x128xf32>
      tpu.vector_store %arg7[%c0_104, %c2_105, %c0_106], %206 {strides = array<i32>} : memref<1x8x128xf32, #tpu.memory_space<vmem>>, vector<1x1x128xf32>,
      %c3_107 = arith.constant 3 : index
      %c0_108 = arith.constant 0 : index
      %c0_109 = arith.constant 0 : index
      %208 = vector.load %arg8[%c3_107, %c0_108, %c0_109] : memref<7x8x256xf32, #tpu.memory_space<vmem>>, vector<1x8x256xf32>
      %209 = vector.shape_cast %208 : vector<1x8x256xf32> to vector<8x256xf32>
      %210 = vector.shape_cast %209 : vector<8x256xf32> to vector<1x8x256xf32>
      %cst_110 = arith.constant dense<0.000000e+00> : vector<1xf32>
      %211 = vector.multi_reduction <add>, %210, %cst_110 [1, 2] : vector<1x8x256xf32> to vector<1xf32>
      %212 = vector.shape_cast %211 : vector<1xf32> to vector<1x1x1xf32>
      %213 = vector.extract %212[0, 0, 0] : f32 from vector<1x1x1xf32>
      %214 = vector.broadcast %213 : f32 to vector<1x1x128xf32>
      %c0_111 = arith.constant 0 : index
      %c3_112 = arith.constant 3 : index
      %c0_113 = arith.constant 0 : index
      %215 = vector.load %arg7[%c0_111, %c3_112, %c0_113] : memref<1x8x128xf32, #tpu.memory_space<vmem>>, vector<1x1x128xf32>
      tpu.vector_store %arg7[%c0_111, %c3_112, %c0_113], %214 {strides = array<i32>} : memref<1x8x128xf32, #tpu.memory_space<vmem>>, vector<1x1x128xf32>,
      %c4_114 = arith.constant 4 : index
      %c0_115 = arith.constant 0 : index
      %c0_116 = arith.constant 0 : index
      %216 = vector.load %arg8[%c4_114, %c0_115, %c0_116] : memref<7x8x256xf32, #tpu.memory_space<vmem>>, vector<1x8x256xf32>
      %217 = vector.shape_cast %216 : vector<1x8x256xf32> to vector<8x256xf32>
      %218 = vector.shape_cast %217 : vector<8x256xf32> to vector<1x8x256xf32>
      %cst_117 = arith.constant dense<0.000000e+00> : vector<1xf32>
      %219 = vector.multi_reduction <add>, %218, %cst_117 [1, 2] : vector<1x8x256xf32> to vector<1xf32>
      %220 = vector.shape_cast %219 : vector<1xf32> to vector<1x1x1xf32>
      %221 = vector.extract %220[0, 0, 0] : f32 from vector<1x1x1xf32>
      %222 = vector.broadcast %221 : f32 to vector<1x1x128xf32>
      %c0_118 = arith.constant 0 : index
      %c4_119 = arith.constant 4 : index
      %c0_120 = arith.constant 0 : index
      %223 = vector.load %arg7[%c0_118, %c4_119, %c0_120] : memref<1x8x128xf32, #tpu.memory_space<vmem>>, vector<1x1x128xf32>
      tpu.vector_store %arg7[%c0_118, %c4_119, %c0_120], %222 {strides = array<i32>} : memref<1x8x128xf32, #tpu.memory_space<vmem>>, vector<1x1x128xf32>,
      %c5_121 = arith.constant 5 : index
      %c0_122 = arith.constant 0 : index
      %c0_123 = arith.constant 0 : index
      %224 = vector.load %arg8[%c5_121, %c0_122, %c0_123] : memref<7x8x256xf32, #tpu.memory_space<vmem>>, vector<1x8x256xf32>
      %225 = vector.shape_cast %224 : vector<1x8x256xf32> to vector<8x256xf32>
      %226 = vector.shape_cast %225 : vector<8x256xf32> to vector<1x8x256xf32>
      %cst_124 = arith.constant dense<0.000000e+00> : vector<1xf32>
      %227 = vector.multi_reduction <add>, %226, %cst_124 [1, 2] : vector<1x8x256xf32> to vector<1xf32>
      %228 = vector.shape_cast %227 : vector<1xf32> to vector<1x1x1xf32>
      %229 = vector.extract %228[0, 0, 0] : f32 from vector<1x1x1xf32>
      %230 = vector.broadcast %229 : f32 to vector<1x1x128xf32>
      %c0_125 = arith.constant 0 : index
      %c5_126 = arith.constant 5 : index
      %c0_127 = arith.constant 0 : index
      %231 = vector.load %arg7[%c0_125, %c5_126, %c0_127] : memref<1x8x128xf32, #tpu.memory_space<vmem>>, vector<1x1x128xf32>
      tpu.vector_store %arg7[%c0_125, %c5_126, %c0_127], %230 {strides = array<i32>} : memref<1x8x128xf32, #tpu.memory_space<vmem>>, vector<1x1x128xf32>,
      %c6_128 = arith.constant 6 : index
      %c0_129 = arith.constant 0 : index
      %c0_130 = arith.constant 0 : index
      %232 = vector.load %arg8[%c6_128, %c0_129, %c0_130] : memref<7x8x256xf32, #tpu.memory_space<vmem>>, vector<1x8x256xf32>
      %233 = vector.shape_cast %232 : vector<1x8x256xf32> to vector<8x256xf32>
      %234 = vector.shape_cast %233 : vector<8x256xf32> to vector<1x8x256xf32>
      %cst_131 = arith.constant dense<0.000000e+00> : vector<1xf32>
      %235 = vector.multi_reduction <add>, %234, %cst_131 [1, 2] : vector<1x8x256xf32> to vector<1xf32>
      %236 = vector.shape_cast %235 : vector<1xf32> to vector<1x1x1xf32>
      %237 = vector.extract %236[0, 0, 0] : f32 from vector<1x1x1xf32>
      %238 = vector.broadcast %237 : f32 to vector<1x1x128xf32>
      %c0_132 = arith.constant 0 : index
      %c6_133 = arith.constant 6 : index
      %c0_134 = arith.constant 0 : index
      %239 = vector.load %arg7[%c0_132, %c6_133, %c0_134] : memref<1x8x128xf32, #tpu.memory_space<vmem>>, vector<1x1x128xf32>
      tpu.vector_store %arg7[%c0_132, %c6_133, %c0_134], %238 {strides = array<i32>} : memref<1x8x128xf32, #tpu.memory_space<vmem>>, vector<1x1x128xf32>,
      %cst_135 = arith.constant 0.000000e+00 : f32
      %240 = vector.broadcast %cst_135 : f32 to vector<1x1x128xf32>
      %c0_136 = arith.constant 0 : index
      %c7 = arith.constant 7 : index
      %c0_137 = arith.constant 0 : index
      %241 = vector.load %arg7[%c0_136, %c7, %c0_137] : memref<1x8x128xf32, #tpu.memory_space<vmem>>, vector<1x1x128xf32>
      tpu.vector_store %arg7[%c0_136, %c7, %c0_137], %240 {strides = array<i32>} : memref<1x8x128xf32, #tpu.memory_space<vmem>>, vector<1x1x128xf32>,
    } else {
    }
    return
  }
  func.func @transform_0(%arg0: i32, %arg1: i32) -> (i32, i32, i32) {
    %c1_i32 = arith.constant 1 : i32
    %0 = arith.muli %arg0, %c1_i32 : i32
    %1 = arith.addi %0, %arg1 : i32
    %c0_i32 = arith.constant 0 : i32
    %c0_i32_0 = arith.constant 0 : i32
    %c0_i32_1 = arith.constant 0 : i32
    return %1, %c0_i32, %c0_i32_0 : i32, i32, i32
  }
  func.func @transform_1(%arg0: i32, %arg1: i32) -> (i32, i32, i32) {
    %c1_i32 = arith.constant 1 : i32
    %0 = arith.muli %arg0, %c1_i32 : i32
    %1 = arith.addi %0, %arg1 : i32
    %c0_i32 = arith.constant 0 : i32
    %c0_i32_0 = arith.constant 0 : i32
    %c0_i32_1 = arith.constant 0 : i32
    return %1, %c0_i32, %c0_i32_0 : i32, i32, i32
  }
  func.func @transform_2(%arg0: i32, %arg1: i32) -> (i32, i32, i32) {
    %c1_i32 = arith.constant 1 : i32
    %0 = arith.muli %arg0, %c1_i32 : i32
    %1 = arith.addi %0, %arg1 : i32
    %c0_i32 = arith.constant 0 : i32
    %c0_i32_0 = arith.constant 0 : i32
    %c0_i32_1 = arith.constant 0 : i32
    return %1, %c0_i32, %c0_i32_0 : i32, i32, i32
  }
  func.func @transform_3(%arg0: i32, %arg1: i32) -> (i32, i32) {
    %c1_i32 = arith.constant 1 : i32
    %0 = arith.muli %arg0, %c1_i32 : i32
    %1 = arith.addi %0, %arg1 : i32
    %c0_i32 = arith.constant 0 : i32
    %c0_i32_0 = arith.constant 0 : i32
    return %1, %c0_i32 : i32, i32
  }
  func.func @transform_4(%arg0: i32, %arg1: i32) -> (i32, i32) {
    %c1_i32 = arith.constant 1 : i32
    %0 = arith.muli %arg0, %c1_i32 : i32
    %1 = arith.addi %0, %arg1 : i32
    %c0_i32 = arith.constant 0 : i32
    %c0_i32_0 = arith.constant 0 : i32
    return %1, %c0_i32 : i32, i32
  }
  func.func @transform_5(%arg0: i32, %arg1: i32) -> (i32, i32, i32) {
    %c0_i32 = arith.constant 0 : i32
    %c0_i32_0 = arith.constant 0 : i32
    %c0_i32_1 = arith.constant 0 : i32
    return %arg0, %c0_i32, %c0_i32_0 : i32, i32, i32
  }
}

</mosaic_0001>

<llo_original>
// kernel: tpu_custom_call.1
$region0: #{tpu_custom_call.1}
  #allocation0 [shape = 'u32[]', space=smem, size = 0x4, offset = 0x4, fixed_abs, tag = 'smem constant byte address 0x4 - core index']
  #allocation1 [shape = 'u32[144,128]{1,0:T(1,128)}', space=vmem, size = 0x12000, scoped, tag = 'internal scratch']
  #allocation2 [shape = 'f32[7,8,256]{2,1,0:T(8,128)}', space=vmem, size = 0xe000, scoped, tag = 'scratch operand']
  %s0 = inlined_call_operand.vmem [shape: f32[8,3,256], index: 0, kind: input, shape index: {}]
  %s1 = inlined_call_operand.vmem [shape: f32[8,4,256], index: 1, kind: input, shape index: {}]
  %s2 = inlined_call_operand.hbm [shape: f32[8,4,256], index: 2, kind: input, shape index: {}]
  %s3 = inlined_call_operand.vmem [shape: s32[8,256], index: 3, kind: input, shape index: {}]
  %s4 = inlined_call_operand.vmem [shape: s32[8,256], index: 4, kind: input, shape index: {}]
  %s5 = inlined_call_operand.hbm [shape: f32[1,8,128], index: 5, kind: output, shape index: {}]
  %s6 = sld [smem:[#allocation0]]
  $region42: #{tpu_custom_call.1} parent=0
    _
  %s8 = ssub.s32 1, %s6
  %s9 = scalar_select 0, %s8, %s6
  $region1: #{tpu_custom_call.1} parent=0
    #allocation3 [shape = 'u8[32768]{0}', space=vmem, size = 0x8000, scoped, tag = 'input window, operand 2, single buffered']
    #allocation4 [shape = 's32[1]{0}', space=sflag, size = 0x4, scoped, tag = 'scoped memory for tpu_custom_call.1']
    #allocation5 [shape = 's32[1]{0}', space=sflag, size = 0x4, scoped, tag = 'scoped memory for tpu_custom_call.1']
    #allocation6 [shape = 'u8[4096]{0}', space=vmem, size = 0x1000, scoped, tag = 'output window, operand 0, single buffered']
    %10 = vsyncpa [#allocation4], 0
    %11 = vsyncpa [#allocation5], 0
    // Predicated region
    $region2: #{tpu_custom_call.1} parent=1 // pred_check
      _
    $region3: #{tpu_custom_call.1} parent=1 // pred_check_branch
      %13 = sbr.rel (0) target = $region5
    $region4: #{tpu_custom_call.1} parent=1 // pred_region
      %s14 = sadd.s32 0, 0
      %s15 = smul.u32 8, %s14
      %p16 = scmp.lt.s32.totalorder %s15, 7
      %s17 = scalar_select %p16, %s15, 7
      %s18 = smul.addr %s17, 2
      %s19 = smul.addr %s18, 4
      %s20 = scalar_lea.vmem %s0, %s19
      %s21 = sadd.s32 0, 0
      %s22 = smul.u32 8, %s21
    $region5: #{tpu_custom_call.1} parent=1 // pred_fallthru
      _
    // Predicated region
    $region6: #{tpu_custom_call.1} parent=1 // pred_check
      _
    $region7: #{tpu_custom_call.1} parent=1 // pred_check_branch
      %24 = sbr.rel (0) target = $region9
    $region8: #{tpu_custom_call.1} parent=1 // pred_region
      %s25 = sadd.s32 0, 0
      %s26 = smul.u32 8, %s25
      %p27 = scmp.lt.s32.totalorder %s26, 7
      %s28 = scalar_select %p27, %s26, 7
      %s29 = smul.addr %s28, 2
      %s30 = smul.addr %s29, 4
      %s31 = scalar_lea.vmem %s1, %s30
      %s32 = sadd.s32 0, 0
      %s33 = smul.u32 8, %s32
    $region9: #{tpu_custom_call.1} parent=1 // pred_fallthru
      _
    // Predicated region
    $region10: #{tpu_custom_call.1} parent=1 // pred_check
      _
    $region11: #{tpu_custom_call.1} parent=1 // pred_check_branch
      %35 = sbr.rel (0) target = $region13
    $region12: #{tpu_custom_call.1} parent=1 // pred_region
      %s36 = sadd.s32 0, 0
      %s37 = smul.u32 8, %s36
      %s39 = ssub.s32 1024, 1024
      %40 = vsyncadd [#allocation4], %s39
      %s41 = smul.addr %s37, 2
      %s42 = smul.addr %s41, 64
      %s43 = scalar_lea.hbm %s2, %s42
      %s44 = sshll.u32 [#allocation3], 4
      %s45 = int_to_ptr.vmem [resolvable:$true] %s44
      %50 = dma.hbm_to_vmem [thread:$0]  %s43, 1024, %s45, [#allocation4], 128, 128, 8
    $region13: #{tpu_custom_call.1} parent=1 // pred_fallthru
      _
    // Predicated region
    $region14: #{tpu_custom_call.1} parent=1 // pred_check
      _
    $region15: #{tpu_custom_call.1} parent=1 // pred_check_branch
      %52 = sbr.rel (0) target = $region17
    $region16: #{tpu_custom_call.1} parent=1 // pred_region
      %s53 = sadd.s32 0, 0
      %p54 = scmp.lt.s32.totalorder %s53, 0
      %s55 = scalar_select %p54, %s53, 0
      %s56 = smul.addr %s55, 2
      %s57 = smul.addr %s56, 8
      %s58 = scalar_lea.vmem %s3, %s57
      %s59 = sadd.s32 0, 0
    $region17: #{tpu_custom_call.1} parent=1 // pred_fallthru
      _
    // Predicated region
    $region18: #{tpu_custom_call.1} parent=1 // pred_check
      _
    $region19: #{tpu_custom_call.1} parent=1 // pred_check_branch
      %61 = sbr.rel (0) target = $region21
    $region20: #{tpu_custom_call.1} parent=1 // pred_region
      %s62 = sadd.s32 0, 0
      %p63 = scmp.lt.s32.totalorder %s62, 0
      %s64 = scalar_select %p63, %s62, 0
      %s65 = smul.addr %s64, 2
      %s66 = smul.addr %s65, 8
      %s67 = scalar_lea.vmem %s4, %s66
      %s68 = sadd.s32 0, 0
    $region21: #{tpu_custom_call.1} parent=1 // pred_fallthru
      _
    // Predicated region
    $region22: #{tpu_custom_call.1} parent=1 // pred_check
      _
    $region23: #{tpu_custom_call.1} parent=1 // pred_check_branch
      %70 = sbr.rel (0) target = $region25
    $region24: #{tpu_custom_call.1} parent=1 // pred_region
      %71 = dma.done [#allocation4], 1024
    $region25: #{tpu_custom_call.1} parent=1 // pred_fallthru
      _
    %s72 = sadd.s32 0, 0
    %s73 = smul.u32 8, %s72
    %p74 = scmp.lt.s32.totalorder %s73, 7
    %s75 = scalar_select %p74, %s73, 7
    %s76 = smul.addr %s75, 2
    %s77 = smul.addr %s76, 4
    %s78 = scalar_lea.vmem %s0, %s77
    %s79 = sadd.s32 0, 0
    %s80 = smul.u32 8, %s79
    %p81 = scmp.lt.s32.totalorder %s80, 7
    %s82 = scalar_select %p81, %s80, 7
    %s83 = smul.addr %s82, 2
    %s84 = smul.addr %s83, 4
    %s85 = scalar_lea.vmem %s1, %s84
    %s86 = sadd.s32 0, 0
    %p87 = scmp.lt.s32.totalorder %s86, 0
    %s88 = scalar_select %p87, %s86, 0
    %s89 = smul.addr %s88, 2
    %s90 = smul.addr %s89, 8
    %s91 = scalar_lea.vmem %s3, %s90
    %s92 = sadd.s32 0, 0
    %p93 = scmp.lt.s32.totalorder %s92, 0
    %s94 = scalar_select %p93, %s92, 0
    %s95 = smul.addr %s94, 2
    %s96 = smul.addr %s95, 8
    %s97 = scalar_lea.vmem %s4, %s96
    %s98 = sadd.s32 0, 0
    %s99 = smul.u32 8, %s98
    %p100 = scmp.lt.s32.totalorder %s99, 7
    %s101 = scalar_select %p100, %s99, 7
    %s102 = smul.addr %s101, 2
    %s103 = smul.addr %s102, 4
    %s104 = scalar_lea.vmem %s0, %s103
    %s105 = sadd.s32 0, 0
    %s106 = smul.u32 8, %s105
    %s107 = sadd.s32 0, 0
    %s108 = smul.u32 8, %s107
    %p109 = scmp.lt.s32.totalorder %s108, 7
    %s110 = scalar_select %p109, %s108, 7
    %s111 = smul.addr %s110, 2
    %s112 = smul.addr %s111, 4
    %s113 = scalar_lea.vmem %s1, %s112
    %s114 = sadd.s32 0, 0
    %s115 = smul.u32 8, %s114
    %s116 = sadd.s32 0, 0
    %s117 = smul.u32 8, %s116
    %s118 = sadd.s32 0, 0
    %p119 = scmp.lt.s32.totalorder %s118, 0
    %s120 = scalar_select %p119, %s118, 0
    %s121 = smul.addr %s120, 2
    %s122 = smul.addr %s121, 8
    %s123 = scalar_lea.vmem %s3, %s122
    %s124 = sadd.s32 0, 0
    %s125 = sadd.s32 0, 0
    %p126 = scmp.lt.s32.totalorder %s125, 0
    %s127 = scalar_select %p126, %s125, 0
    %s128 = smul.addr %s127, 2
    %s129 = smul.addr %s128, 8
    %s130 = scalar_lea.vmem %s4, %s129
    %s131 = sadd.s32 0, 0
    %p132 = scmp.eq.s32.totalorder 0, 0
    // Predicated region
    $region26: #{tpu_custom_call.1} parent=1 // pred_check
      %p133 = pneg %p132
    $region27: #{tpu_custom_call.1} parent=1 // pred_check_branch
      %135 = sbr.rel (%p133) target = $region29
    $region28: #{tpu_custom_call.1} parent=1 // pred_region
      %136 = vst [vmem:[#allocation2] sm:$0xff] 0.0
      %137 = vst [vmem:[#allocation2 + $0x8] sm:$0xff] 0.0
      %138 = vst [vmem:[#allocation2 + $0x10] sm:$0xff] 0.0
      %139 = vst [vmem:[#allocation2 + $0x18] sm:$0xff] 0.0
      %140 = vst [vmem:[#allocation2 + $0x20] sm:$0xff] 0.0
      %141 = vst [vmem:[#allocation2 + $0x28] sm:$0xff] 0.0
      %142 = vst [vmem:[#allocation2 + $0x30] sm:$0xff] 0.0
      %143 = vst [vmem:[#allocation2 + $0x38] sm:$0xff] 0.0
      %144 = vst [vmem:[#allocation2 + $0x40] sm:$0xff] 0.0
      %145 = vst [vmem:[#allocation2 + $0x48] sm:$0xff] 0.0
      %146 = vst [vmem:[#allocation2 + $0x50] sm:$0xff] 0.0
      %147 = vst [vmem:[#allocation2 + $0x58] sm:$0xff] 0.0
      %148 = vst [vmem:[#allocation2 + $0x60] sm:$0xff] 0.0
      %149 = vst [vmem:[#allocation2 + $0x68] sm:$0xff] 0.0
    $region29: #{tpu_custom_call.1} parent=1 // pred_fallthru
      _
    %v150 = vld [vmem:[%s104] sm:$0x77]
    %v151 = vld [vmem:[%s104 + $0x8] sm:$0x77]
    %v152 = vld [vmem:[%s104 + $0x10] sm:$0x77]
    %v153 = vld [vmem:[%s104 + $0x18] sm:$0x77]
    %v154 = vld [vmem:[%s104 + $0x20] sm:$0x77]
    %v155 = vld [vmem:[%s104 + $0x28] sm:$0x77]
    %v156 = vld [vmem:[%s104 + $0x30] sm:$0x77]
    %v157 = vld [vmem:[%s104 + $0x38] sm:$0x77]
    %v158 = vld [vmem:[%s113] sm:$0xff]
    %v159 = vld [vmem:[%s113 + $0x8] sm:$0xff]
    %v160 = vld [vmem:[%s113 + $0x10] sm:$0xff]
    %v161 = vld [vmem:[%s113 + $0x18] sm:$0xff]
    %v162 = vld [vmem:[%s113 + $0x20] sm:$0xff]
    %v163 = vld [vmem:[%s113 + $0x28] sm:$0xff]
    %v164 = vld [vmem:[%s113 + $0x30] sm:$0xff]
    %v165 = vld [vmem:[%s113 + $0x38] sm:$0xff]
    %v166 = vld [vmem:[#allocation3] sm:$0xff]
    %v167 = vld [vmem:[#allocation3 + $0x8] sm:$0xff]
    %v168 = vld [vmem:[#allocation3 + $0x10] sm:$0xff]
    %v169 = vld [vmem:[#allocation3 + $0x18] sm:$0xff]
    %v170 = vld [vmem:[#allocation3 + $0x20] sm:$0xff]
    %v171 = vld [vmem:[#allocation3 + $0x28] sm:$0xff]
    %v172 = vld [vmem:[#allocation3 + $0x30] sm:$0xff]
    %v173 = vld [vmem:[#allocation3 + $0x38] sm:$0xff]
    %v174 = vld [vmem:[%s123] sm:$0xff]
    %v175 = vld [vmem:[%s123 + $0x8] sm:$0xff]
    %v176 = vld [vmem:[%s130] sm:$0xff]
    %v177 = vld [vmem:[%s130 + $0x8] sm:$0xff]
    %v186 = vcombine.high %v150, %v150
    %v187 = vcombine.high %v151, %v151
    %v188 = vcombine.high %v152, %v152
    %v189 = vcombine.high %v153, %v153
    %v190 = vcombine.high %v154, %v154
    %v191 = vcombine.high %v155, %v155
    %v192 = vcombine.high %v156, %v156
    %v193 = vcombine.high %v157, %v157
    %vm202 = vcmask 1042432
    %v203 = vsel %vm202, %v150, -inf
    %v204 = vrot.slane %v203, 4
    %v205 = vmax.f32 %v203, %v204
    %v206 = vrot.slane %v205, 2
    %v207 = vmax.f32 %v205, %v206
    %v208 = vrot.slane %v207, 1
    %v209 = vmax.f32 %v207, %v208
    %v210 = vsel %vm202, %v186, -inf
    %v211 = vrot.slane %v210, 4
    %v212 = vmax.f32 %v210, %v211
    %v213 = vrot.slane %v212, 2
    %v214 = vmax.f32 %v212, %v213
    %v215 = vrot.slane %v214, 1
    %v216 = vmax.f32 %v214, %v215
    %v217 = vsel %vm202, %v151, -inf
    %v218 = vrot.slane %v217, 4
    %v219 = vmax.f32 %v217, %v218
    %v220 = vrot.slane %v219, 2
    %v221 = vmax.f32 %v219, %v220
    %v222 = vrot.slane %v221, 1
    %v223 = vmax.f32 %v221, %v222
    %v224 = vsel %vm202, %v187, -inf
    %v225 = vrot.slane %v224, 4
    %v226 = vmax.f32 %v224, %v225
    %v227 = vrot.slane %v226, 2
    %v228 = vmax.f32 %v226, %v227
    %v229 = vrot.slane %v228, 1
    %v230 = vmax.f32 %v228, %v229
    %v231 = vsel %vm202, %v152, -inf
    %v232 = vrot.slane %v231, 4
    %v233 = vmax.f32 %v231, %v232
    %v234 = vrot.slane %v233, 2
    %v235 = vmax.f32 %v233, %v234
    %v236 = vrot.slane %v235, 1
    %v237 = vmax.f32 %v235, %v236
    %v238 = vsel %vm202, %v188, -inf
    %v239 = vrot.slane %v238, 4
    %v240 = vmax.f32 %v238, %v239
    %v241 = vrot.slane %v240, 2
    %v242 = vmax.f32 %v240, %v241
    %v243 = vrot.slane %v242, 1
    %v244 = vmax.f32 %v242, %v243
    %v245 = vsel %vm202, %v153, -inf
    %v246 = vrot.slane %v245, 4
    %v247 = vmax.f32 %v245, %v246
    %v248 = vrot.slane %v247, 2
    %v249 = vmax.f32 %v247, %v248
    %v250 = vrot.slane %v249, 1
    %v251 = vmax.f32 %v249, %v250
    %v252 = vsel %vm202, %v189, -inf
    %v253 = vrot.slane %v252, 4
    %v254 = vmax.f32 %v252, %v253
    %v255 = vrot.slane %v254, 2
    %v256 = vmax.f32 %v254, %v255
    %v257 = vrot.slane %v256, 1
    %v258 = vmax.f32 %v256, %v257
    %v259 = vsel %vm202, %v154, -inf
    %v260 = vrot.slane %v259, 4
    %v261 = vmax.f32 %v259, %v260
    %v262 = vrot.slane %v261, 2
    %v263 = vmax.f32 %v261, %v262
    %v264 = vrot.slane %v263, 1
    %v265 = vmax.f32 %v263, %v264
    %v266 = vsel %vm202, %v190, -inf
    %v267 = vrot.slane %v266, 4
    %v268 = vmax.f32 %v266, %v267
    %v269 = vrot.slane %v268, 2
    %v270 = vmax.f32 %v268, %v269
    %v271 = vrot.slane %v270, 1
    %v272 = vmax.f32 %v270, %v271
    %v273 = vsel %vm202, %v155, -inf
    %v274 = vrot.slane %v273, 4
    %v275 = vmax.f32 %v273, %v274
    %v276 = vrot.slane %v275, 2
    %v277 = vmax.f32 %v275, %v276
    %v278 = vrot.slane %v277, 1
    %v279 = vmax.f32 %v277, %v278
    %v280 = vsel %vm202, %v191, -inf
    %v281 = vrot.slane %v280, 4
    %v282 = vmax.f32 %v280, %v281
    %v283 = vrot.slane %v282, 2
    %v284 = vmax.f32 %v282, %v283
    %v285 = vrot.slane %v284, 1
    %v286 = vmax.f32 %v284, %v285
    %v287 = vsel %vm202, %v156, -inf
    %v288 = vrot.slane %v287, 4
    %v289 = vmax.f32 %v287, %v288
    %v290 = vrot.slane %v289, 2
    %v291 = vmax.f32 %v289, %v290
    %v292 = vrot.slane %v291, 1
    %v293 = vmax.f32 %v291, %v292
    %v294 = vsel %vm202, %v192, -inf
    %v295 = vrot.slane %v294, 4
    %v296 = vmax.f32 %v294, %v295
    %v297 = vrot.slane %v296, 2
    %v298 = vmax.f32 %v296, %v297
    %v299 = vrot.slane %v298, 1
    %v300 = vmax.f32 %v298, %v299
    %v301 = vsel %vm202, %v157, -inf
    %v302 = vrot.slane %v301, 4
    %v303 = vmax.f32 %v301, %v302
    %v304 = vrot.slane %v303, 2
    %v305 = vmax.f32 %v303, %v304
    %v306 = vrot.slane %v305, 1
    %v307 = vmax.f32 %v305, %v306
    %v308 = vsel %vm202, %v193, -inf
    %v309 = vrot.slane %v308, 4
    %v310 = vmax.f32 %v308, %v309
    %v311 = vrot.slane %v310, 2
    %v312 = vmax.f32 %v310, %v311
    %v313 = vrot.slane %v312, 1
    %v314 = vmax.f32 %v312, %v313
    %v331 = vcombine.low %v209, %v216
    %v332 = vcombine.low %v223, %v230
    %v333 = vcombine.low %v237, %v244
    %v334 = vcombine.low %v251, %v258
    %v335 = vcombine.low %v265, %v272
    %v336 = vcombine.low %v279, %v286
    %v337 = vcombine.low %v293, %v300
    %v338 = vcombine.low %v307, %v314
    %v347 = vsub.f32 %v150, %v331
    %v348 = vsub.f32 %v151, %v332
    %v349 = vsub.f32 %v152, %v333
    %v350 = vsub.f32 %v153, %v334
    %v351 = vsub.f32 %v154, %v335
    %v352 = vsub.f32 %v155, %v336
    %v353 = vsub.f32 %v156, %v337
    %v354 = vsub.f32 %v157, %v338
    %v355 = vmul.f32 %v347, 1.442695
    %v356 = vpow.pop %v355
    %v357 = vmul.f32 %v348, 1.442695
    %v358 = vpow.pop %v357
    %v359 = vmul.f32 %v349, 1.442695
    %v360 = vpow.pop %v359
    %v361 = vmul.f32 %v350, 1.442695
    %v362 = vpow.pop %v361
    %v363 = vmul.f32 %v351, 1.442695
    %v364 = vpow.pop %v363
    %v365 = vmul.f32 %v352, 1.442695
    %v366 = vpow.pop %v365
    %v367 = vmul.f32 %v353, 1.442695
    %v368 = vpow.pop %v367
    %v369 = vmul.f32 %v354, 1.442695
    %v370 = vpow.pop %v369
    %v371 = vadd.f32 %v356, 0.0
    %v372 = vadd.f32 %v358, 0.0
    %v373 = vadd.f32 %v360, 0.0
    %v374 = vadd.f32 %v362, 0.0
    %v375 = vadd.f32 %v364, 0.0
    %v376 = vadd.f32 %v366, 0.0
    %v377 = vadd.f32 %v368, 0.0
    %v378 = vadd.f32 %v370, 0.0
    %vm379 = vcmp.eq.s32.totalorder %v174, 0
    %vm380 = vcmp.eq.s32.totalorder %v175, 0
    %v389 = vlaneseq
    %v390 = vshrl.u32 %v389, 7
    %v391 = vsub.s32 0, %v390
    %v392 = vrot.slane %v356, %v391
    %v393 = vlaneseq
    %v394 = vshrl.u32 %v393, 7
    %v395 = vsub.s32 4, %v394
    %v396 = vrot.slane %v356, %v395
    %v397 = vlaneseq
    %v398 = vshrl.u32 %v397, 7
    %v399 = vsub.s32 0, %v398
    %v400 = vrot.slane %v358, %v399
    %v401 = vlaneseq
    %v402 = vshrl.u32 %v401, 7
    %v403 = vsub.s32 4, %v402
    %v404 = vrot.slane %v358, %v403
    %v405 = vlaneseq
    %v406 = vshrl.u32 %v405, 7
    %v407 = vsub.s32 0, %v406
    %v408 = vrot.slane %v360, %v407
    %v409 = vlaneseq
    %v410 = vshrl.u32 %v409, 7
    %v411 = vsub.s32 4, %v410
    %v412 = vrot.slane %v360, %v411
    %v413 = vlaneseq
    %v414 = vshrl.u32 %v413, 7
    %v415 = vsub.s32 0, %v414
    %v416 = vrot.slane %v362, %v415
    %v417 = vlaneseq
    %v418 = vshrl.u32 %v417, 7
    %v419 = vsub.s32 4, %v418
    %v420 = vrot.slane %v362, %v419
    %v421 = vlaneseq
    %v422 = vshrl.u32 %v421, 7
    %v423 = vsub.s32 0, %v422
    %v424 = vrot.slane %v364, %v423
    %v425 = vlaneseq
    %v426 = vshrl.u32 %v425, 7
    %v427 = vsub.s32 4, %v426
    %v428 = vrot.slane %v364, %v427
    %v429 = vlaneseq
    %v430 = vshrl.u32 %v429, 7
    %v431 = vsub.s32 0, %v430
    %v432 = vrot.slane %v366, %v431
    %v433 = vlaneseq
    %v434 = vshrl.u32 %v433, 7
    %v435 = vsub.s32 4, %v434
    %v436 = vrot.slane %v366, %v435
    %v437 = vlaneseq
    %v438 = vshrl.u32 %v437, 7
    %v439 = vsub.s32 0, %v438
    %v440 = vrot.slane %v368, %v439
    %v441 = vlaneseq
    %v442 = vshrl.u32 %v441, 7
    %v443 = vsub.s32 4, %v442
    %v444 = vrot.slane %v368, %v443
    %v445 = vlaneseq
    %v446 = vshrl.u32 %v445, 7
    %v447 = vsub.s32 0, %v446
    %v448 = vrot.slane %v370, %v447
    %v449 = vlaneseq
    %v450 = vshrl.u32 %v449, 7
    %v451 = vsub.s32 4, %v450
    %v452 = vrot.slane %v370, %v451
    %vm453 = vcmask 1041409
    %v454 = vsel %vm453, %v400, %v392
    %vm455 = vcmask 1042434
    %v456 = vsel %vm455, %v408, %v454
    %vm457 = vcmask 1043459
    %v458 = vsel %vm457, %v416, %v456
    %vm459 = vcmask 1044484
    %v460 = vsel %vm459, %v424, %v458
    %vm461 = vcmask 1045509
    %v462 = vsel %vm461, %v432, %v460
    %vm463 = vcmask 1046534
    %v464 = vsel %vm463, %v440, %v462
    %vm465 = vcmask 1047559
    %v466 = vsel %vm465, %v448, %v464
    %v467 = vsel %vm453, %v404, %v396
    %v468 = vsel %vm455, %v412, %v467
    %v469 = vsel %vm457, %v420, %v468
    %v470 = vsel %vm459, %v428, %v469
    %v471 = vsel %vm461, %v436, %v470
    %v472 = vsel %vm463, %v444, %v471
    %v473 = vsel %vm465, %v452, %v472
    %v476 = vsel %vm379, %v466, 0.0
    %v477 = vsel %vm380, %v473, 0.0
    %vm478 = vcmp.eq.s32.totalorder %v176, 0
    %vm479 = vcmp.eq.s32.totalorder %v177, 0
    %v480 = vsel %vm478, %v466, 0.0
    %v481 = vsel %vm479, %v473, 0.0
    %vm482 = vcmp.eq.f32.partialorder %v347, 0.0
    %vm483 = vcmp.eq.f32.partialorder %v348, 0.0
    %vm484 = vcmp.eq.f32.partialorder %v349, 0.0
    %vm485 = vcmp.eq.f32.partialorder %v350, 0.0
    %vm486 = vcmp.eq.f32.partialorder %v351, 0.0
    %vm487 = vcmp.eq.f32.partialorder %v352, 0.0
    %vm488 = vcmp.eq.f32.partialorder %v353, 0.0
    %vm489 = vcmp.eq.f32.partialorder %v354, 0.0
    %v490 = vsel %vm482, 0, 3
    %v491 = vsel %vm483, 0, 3
    %v492 = vsel %vm484, 0, 3
    %v493 = vsel %vm485, 0, 3
    %v494 = vsel %vm486, 0, 3
    %v495 = vsel %vm487, 0, 3
    %v496 = vsel %vm488, 0, 3
    %v497 = vsel %vm489, 0, 3
    %v498 = vsel %vm482, %v490, 3
    %v499 = vsel %vm483, %v491, 3
    %v500 = vsel %vm484, %v492, 3
    %v501 = vsel %vm485, %v493, 3
    %v502 = vsel %vm486, %v494, 3
    %v503 = vsel %vm487, %v495, 3
    %v504 = vsel %vm488, %v496, 3
    %v505 = vsel %vm489, %v497, 3
    %v506 = vrot.slane %v331, 7
    %v507 = vrot.slane %v332, 7
    %v508 = vrot.slane %v333, 7
    %v509 = vrot.slane %v334, 7
    %v510 = vrot.slane %v335, 7
    %v511 = vrot.slane %v336, 7
    %v512 = vrot.slane %v337, 7
    %v513 = vrot.slane %v338, 7
    %v522 = vsub.f32 %v150, %v506
    %v523 = vsub.f32 %v151, %v507
    %v524 = vsub.f32 %v152, %v508
    %v525 = vsub.f32 %v153, %v509
    %v526 = vsub.f32 %v154, %v510
    %v527 = vsub.f32 %v155, %v511
    %v528 = vsub.f32 %v156, %v512
    %v529 = vsub.f32 %v157, %v513
    %v530 = vmul.f32 %v522, 1.442695
    %v531 = vpow.pop %v530
    %v532 = vmul.f32 %v523, 1.442695
    %v533 = vpow.pop %v532
    %v534 = vmul.f32 %v524, 1.442695
    %v535 = vpow.pop %v534
    %v536 = vmul.f32 %v525, 1.442695
    %v537 = vpow.pop %v536
    %v538 = vmul.f32 %v526, 1.442695
    %v539 = vpow.pop %v538
    %v540 = vmul.f32 %v527, 1.442695
    %v541 = vpow.pop %v540
    %v542 = vmul.f32 %v528, 1.442695
    %v543 = vpow.pop %v542
    %v544 = vmul.f32 %v529, 1.442695
    %v545 = vpow.pop %v544
    %v554 = vrot.slane %v531, 5
    %v555 = vrot.slane %v554, 4
    %v556 = vrot.slane %v533, 5
    %v557 = vrot.slane %v556, 4
    %v558 = vrot.slane %v535, 5
    %v559 = vrot.slane %v558, 4
    %v560 = vrot.slane %v537, 5
    %v561 = vrot.slane %v560, 4
    %v562 = vrot.slane %v539, 5
    %v563 = vrot.slane %v562, 4
    %v564 = vrot.slane %v541, 5
    %v565 = vrot.slane %v564, 4
    %v566 = vrot.slane %v543, 5
    %v567 = vrot.slane %v566, 4
    %v568 = vrot.slane %v545, 5
    %v569 = vrot.slane %v568, 4
    %v578 = vadd.f32 %v371, %v555
    %v579 = vadd.f32 %v372, %v557
    %v580 = vadd.f32 %v373, %v559
    %v581 = vadd.f32 %v374, %v561
    %v582 = vadd.f32 %v375, %v563
    %v583 = vadd.f32 %v376, %v565
    %v584 = vadd.f32 %v377, %v567
    %v585 = vadd.f32 %v378, %v569
    %vm586 = vcmp.eq.s32.totalorder %v174, 1
    %vm587 = vcmp.eq.s32.totalorder %v175, 1
    %v588 = vlaneseq
    %v589 = vshrl.u32 %v588, 7
    %v590 = vsub.s32 1, %v589
    %v591 = vrot.slane %v531, %v590
    %v592 = vlaneseq
    %v593 = vshrl.u32 %v592, 7
    %v594 = vsub.s32 5, %v593
    %v595 = vrot.slane %v531, %v594
    %v596 = vlaneseq
    %v597 = vshrl.u32 %v596, 7
    %v598 = vsub.s32 1, %v597
    %v599 = vrot.slane %v533, %v598
    %v600 = vlaneseq
    %v601 = vshrl.u32 %v600, 7
    %v602 = vsub.s32 5, %v601
    %v603 = vrot.slane %v533, %v602
    %v604 = vlaneseq
    %v605 = vshrl.u32 %v604, 7
    %v606 = vsub.s32 1, %v605
    %v607 = vrot.slane %v535, %v606
    %v608 = vlaneseq
    %v609 = vshrl.u32 %v608, 7
    %v610 = vsub.s32 5, %v609
    %v611 = vrot.slane %v535, %v610
    %v612 = vlaneseq
    %v613 = vshrl.u32 %v612, 7
    %v614 = vsub.s32 1, %v613
    %v615 = vrot.slane %v537, %v614
    %v616 = vlaneseq
    %v617 = vshrl.u32 %v616, 7
    %v618 = vsub.s32 5, %v617
    %v619 = vrot.slane %v537, %v618
    %v620 = vlaneseq
    %v621 = vshrl.u32 %v620, 7
    %v622 = vsub.s32 1, %v621
    %v623 = vrot.slane %v539, %v622
    %v624 = vlaneseq
    %v625 = vshrl.u32 %v624, 7
    %v626 = vsub.s32 5, %v625
    %v627 = vrot.slane %v539, %v626
    %v628 = vlaneseq
    %v629 = vshrl.u32 %v628, 7
    %v630 = vsub.s32 1, %v629
    %v631 = vrot.slane %v541, %v630
    %v632 = vlaneseq
    %v633 = vshrl.u32 %v632, 7
    %v634 = vsub.s32 5, %v633
    %v635 = vrot.slane %v541, %v634
    %v636 = vlaneseq
    %v637 = vshrl.u32 %v636, 7
    %v638 = vsub.s32 1, %v637
    %v639 = vrot.slane %v543, %v638
    %v640 = vlaneseq
    %v641 = vshrl.u32 %v640, 7
    %v642 = vsub.s32 5, %v641
    %v643 = vrot.slane %v543, %v642
    %v644 = vlaneseq
    %v645 = vshrl.u32 %v644, 7
    %v646 = vsub.s32 1, %v645
    %v647 = vrot.slane %v545, %v646
    %v648 = vlaneseq
    %v649 = vshrl.u32 %v648, 7
    %v650 = vsub.s32 5, %v649
    %v651 = vrot.slane %v545, %v650
    %v652 = vsel %vm453, %v599, %v591
    %v653 = vsel %vm455, %v607, %v652
    %v654 = vsel %vm457, %v615, %v653
    %v655 = vsel %vm459, %v623, %v654
    %v656 = vsel %vm461, %v631, %v655
    %v657 = vsel %vm463, %v639, %v656
    %v658 = vsel %vm465, %v647, %v657
    %v659 = vsel %vm453, %v603, %v595
    %v660 = vsel %vm455, %v611, %v659
    %v661 = vsel %vm457, %v619, %v660
    %v662 = vsel %vm459, %v627, %v661
    %v663 = vsel %vm461, %v635, %v662
    %v664 = vsel %vm463, %v643, %v663
    %v665 = vsel %vm465, %v651, %v664
    %v668 = vsel %vm586, %v658, %v476
    %v669 = vsel %vm587, %v665, %v477
    %vm670 = vcmp.eq.s32.totalorder %v176, 1
    %vm671 = vcmp.eq.s32.totalorder %v177, 1
    %v672 = vsel %vm670, %v658, %v480
    %v673 = vsel %vm671, %v665, %v481
    %vm674 = vcmp.eq.f32.partialorder %v522, 0.0
    %vm675 = vcmp.eq.f32.partialorder %v523, 0.0
    %vm676 = vcmp.eq.f32.partialorder %v524, 0.0
    %vm677 = vcmp.eq.f32.partialorder %v525, 0.0
    %vm678 = vcmp.eq.f32.partialorder %v526, 0.0
    %vm679 = vcmp.eq.f32.partialorder %v527, 0.0
    %vm680 = vcmp.eq.f32.partialorder %v528, 0.0
    %vm681 = vcmp.eq.f32.partialorder %v529, 0.0
    %v682 = vsel %vm674, 1, 3
    %v683 = vsel %vm675, 1, 3
    %v684 = vsel %vm676, 1, 3
    %v685 = vsel %vm677, 1, 3
    %v686 = vsel %vm678, 1, 3
    %v687 = vsel %vm679, 1, 3
    %v688 = vsel %vm680, 1, 3
    %v689 = vsel %vm681, 1, 3
    %v690 = vrot.slane %v682, 5
    %v691 = vrot.slane %v690, 4
    %v692 = vrot.slane %v683, 5
    %v693 = vrot.slane %v692, 4
    %v694 = vrot.slane %v684, 5
    %v695 = vrot.slane %v694, 4
    %v696 = vrot.slane %v685, 5
    %v697 = vrot.slane %v696, 4
    %v698 = vrot.slane %v686, 5
    %v699 = vrot.slane %v698, 4
    %v700 = vrot.slane %v687, 5
    %v701 = vrot.slane %v700, 4
    %v702 = vrot.slane %v688, 5
    %v703 = vrot.slane %v702, 4
    %v704 = vrot.slane %v689, 5
    %v705 = vrot.slane %v704, 4
    %vm706 = vcmp.lt.s32.totalorder %v498, %v691
    %v707 = vsel %vm706, %v498, %v691
    %vm708 = vcmp.lt.s32.totalorder %v499, %v693
    %v709 = vsel %vm708, %v499, %v693
    %vm710 = vcmp.lt.s32.totalorder %v500, %v695
    %v711 = vsel %vm710, %v500, %v695
    %vm712 = vcmp.lt.s32.totalorder %v501, %v697
    %v713 = vsel %vm712, %v501, %v697
    %vm714 = vcmp.lt.s32.totalorder %v502, %v699
    %v715 = vsel %vm714, %v502, %v699
    %vm716 = vcmp.lt.s32.totalorder %v503, %v701
    %v717 = vsel %vm716, %v503, %v701
    %vm718 = vcmp.lt.s32.totalorder %v504, %v703
    %v719 = vsel %vm718, %v504, %v703
    %vm720 = vcmp.lt.s32.totalorder %v505, %v705
    %v721 = vsel %vm720, %v505, %v705
    %v722 = vrot.slane %v331, 6
    %v723 = vrot.slane %v332, 6
    %v724 = vrot.slane %v333, 6
    %v725 = vrot.slane %v334, 6
    %v726 = vrot.slane %v335, 6
    %v727 = vrot.slane %v336, 6
    %v728 = vrot.slane %v337, 6
    %v729 = vrot.slane %v338, 6
    %v738 = vsub.f32 %v150, %v722
    %v739 = vsub.f32 %v151, %v723
    %v740 = vsub.f32 %v152, %v724
    %v741 = vsub.f32 %v153, %v725
    %v742 = vsub.f32 %v154, %v726
    %v743 = vsub.f32 %v155, %v727
    %v744 = vsub.f32 %v156, %v728
    %v745 = vsub.f32 %v157, %v729
    %v746 = vmul.f32 %v738, 1.442695
    %v747 = vpow.pop %v746
    %v748 = vmul.f32 %v739, 1.442695
    %v749 = vpow.pop %v748
    %v750 = vmul.f32 %v740, 1.442695
    %v751 = vpow.pop %v750
    %v752 = vmul.f32 %v741, 1.442695
    %v753 = vpow.pop %v752
    %v754 = vmul.f32 %v742, 1.442695
    %v755 = vpow.pop %v754
    %v756 = vmul.f32 %v743, 1.442695
    %v757 = vpow.pop %v756
    %v758 = vmul.f32 %v744, 1.442695
    %v759 = vpow.pop %v758
    %v760 = vmul.f32 %v745, 1.442695
    %v761 = vpow.pop %v760
    %v770 = vrot.slane %v747, 6
    %v771 = vrot.slane %v770, 4
    %v772 = vrot.slane %v749, 6
    %v773 = vrot.slane %v772, 4
    %v774 = vrot.slane %v751, 6
    %v775 = vrot.slane %v774, 4
    %v776 = vrot.slane %v753, 6
    %v777 = vrot.slane %v776, 4
    %v778 = vrot.slane %v755, 6
    %v779 = vrot.slane %v778, 4
    %v780 = vrot.slane %v757, 6
    %v781 = vrot.slane %v780, 4
    %v782 = vrot.slane %v759, 6
    %v783 = vrot.slane %v782, 4
    %v784 = vrot.slane %v761, 6
    %v785 = vrot.slane %v784, 4
    %v794 = vadd.f32 %v578, %v771
    %v795 = vadd.f32 %v579, %v773
    %v796 = vadd.f32 %v580, %v775
    %v797 = vadd.f32 %v581, %v777
    %v798 = vadd.f32 %v582, %v779
    %v799 = vadd.f32 %v583, %v781
    %v800 = vadd.f32 %v584, %v783
    %v801 = vadd.f32 %v585, %v785
    %vm802 = vcmp.eq.s32.totalorder %v174, 2
    %vm803 = vcmp.eq.s32.totalorder %v175, 2
    %v804 = vlaneseq
    %v805 = vshrl.u32 %v804, 7
    %v806 = vsub.s32 2, %v805
    %v807 = vrot.slane %v747, %v806
    %v808 = vlaneseq
    %v809 = vshrl.u32 %v808, 7
    %v810 = vsub.s32 6, %v809
    %v811 = vrot.slane %v747, %v810
    %v812 = vlaneseq
    %v813 = vshrl.u32 %v812, 7
    %v814 = vsub.s32 2, %v813
    %v815 = vrot.slane %v749, %v814
    %v816 = vlaneseq
    %v817 = vshrl.u32 %v816, 7
    %v818 = vsub.s32 6, %v817
    %v819 = vrot.slane %v749, %v818
    %v820 = vlaneseq
    %v821 = vshrl.u32 %v820, 7
    %v822 = vsub.s32 2, %v821
    %v823 = vrot.slane %v751, %v822
    %v824 = vlaneseq
    %v825 = vshrl.u32 %v824, 7
    %v826 = vsub.s32 6, %v825
    %v827 = vrot.slane %v751, %v826
    %v828 = vlaneseq
    %v829 = vshrl.u32 %v828, 7
    %v830 = vsub.s32 2, %v829
    %v831 = vrot.slane %v753, %v830
    %v832 = vlaneseq
    %v833 = vshrl.u32 %v832, 7
    %v834 = vsub.s32 6, %v833
    %v835 = vrot.slane %v753, %v834
    %v836 = vlaneseq
    %v837 = vshrl.u32 %v836, 7
    %v838 = vsub.s32 2, %v837
    %v839 = vrot.slane %v755, %v838
    %v840 = vlaneseq
    %v841 = vshrl.u32 %v840, 7
    %v842 = vsub.s32 6, %v841
    %v843 = vrot.slane %v755, %v842
    %v844 = vlaneseq
    %v845 = vshrl.u32 %v844, 7
    %v846 = vsub.s32 2, %v845
    %v847 = vrot.slane %v757, %v846
    %v848 = vlaneseq
    %v849 = vshrl.u32 %v848, 7
    %v850 = vsub.s32 6, %v849
    %v851 = vrot.slane %v757, %v850
    %v852 = vlaneseq
    %v853 = vshrl.u32 %v852, 7
    %v854 = vsub.s32 2, %v853
    %v855 = vrot.slane %v759, %v854
    %v856 = vlaneseq
    %v857 = vshrl.u32 %v856, 7
    %v858 = vsub.s32 6, %v857
    %v859 = vrot.slane %v759, %v858
    %v860 = vlaneseq
    %v861 = vshrl.u32 %v860, 7
    %v862 = vsub.s32 2, %v861
    %v863 = vrot.slane %v761, %v862
    %v864 = vlaneseq
    %v865 = vshrl.u32 %v864, 7
    %v866 = vsub.s32 6, %v865
    %v867 = vrot.slane %v761, %v866
    %v868 = vsel %vm453, %v815, %v807
    %v869 = vsel %vm455, %v823, %v868
    %v870 = vsel %vm457, %v831, %v869
    %v871 = vsel %vm459, %v839, %v870
    %v872 = vsel %vm461, %v847, %v871
    %v873 = vsel %vm463, %v855, %v872
    %v874 = vsel %vm465, %v863, %v873
    %v875 = vsel %vm453, %v819, %v811
    %v876 = vsel %vm455, %v827, %v875
    %v877 = vsel %vm457, %v835, %v876
    %v878 = vsel %vm459, %v843, %v877
    %v879 = vsel %vm461, %v851, %v878
    %v880 = vsel %vm463, %v859, %v879
    %v881 = vsel %vm465, %v867, %v880
    %v884 = vsel %vm802, %v874, %v668
    %v885 = vsel %vm803, %v881, %v669
    %vm886 = vcmp.eq.s32.totalorder %v176, 2
    %vm887 = vcmp.eq.s32.totalorder %v177, 2
    %v888 = vsel %vm886, %v874, %v672
    %v889 = vsel %vm887, %v881, %v673
    %vm890 = vcmp.eq.f32.partialorder %v738, 0.0
    %vm891 = vcmp.eq.f32.partialorder %v739, 0.0
    %vm892 = vcmp.eq.f32.partialorder %v740, 0.0
    %vm893 = vcmp.eq.f32.partialorder %v741, 0.0
    %vm894 = vcmp.eq.f32.partialorder %v742, 0.0
    %vm895 = vcmp.eq.f32.partialorder %v743, 0.0
    %vm896 = vcmp.eq.f32.partialorder %v744, 0.0
    %vm897 = vcmp.eq.f32.partialorder %v745, 0.0
    %v898 = vsel %vm890, 2, 3
    %v899 = vsel %vm891, 2, 3
    %v900 = vsel %vm892, 2, 3
    %v901 = vsel %vm893, 2, 3
    %v902 = vsel %vm894, 2, 3
    %v903 = vsel %vm895, 2, 3
    %v904 = vsel %vm896, 2, 3
    %v905 = vsel %vm897, 2, 3
    %v906 = vrot.slane %v898, 6
    %v907 = vrot.slane %v906, 4
    %v908 = vrot.slane %v899, 6
    %v909 = vrot.slane %v908, 4
    %v910 = vrot.slane %v900, 6
    %v911 = vrot.slane %v910, 4
    %v912 = vrot.slane %v901, 6
    %v913 = vrot.slane %v912, 4
    %v914 = vrot.slane %v902, 6
    %v915 = vrot.slane %v914, 4
    %v916 = vrot.slane %v903, 6
    %v917 = vrot.slane %v916, 4
    %v918 = vrot.slane %v904, 6
    %v919 = vrot.slane %v918, 4
    %v920 = vrot.slane %v905, 6
    %v921 = vrot.slane %v920, 4
    %vm922 = vcmp.lt.s32.totalorder %v707, %v907
    %v923 = vsel %vm922, %v707, %v907
    %vm924 = vcmp.lt.s32.totalorder %v709, %v909
    %v925 = vsel %vm924, %v709, %v909
    %vm926 = vcmp.lt.s32.totalorder %v711, %v911
    %v927 = vsel %vm926, %v711, %v911
    %vm928 = vcmp.lt.s32.totalorder %v713, %v913
    %v929 = vsel %vm928, %v713, %v913
    %vm930 = vcmp.lt.s32.totalorder %v715, %v915
    %v931 = vsel %vm930, %v715, %v915
    %vm932 = vcmp.lt.s32.totalorder %v717, %v917
    %v933 = vsel %vm932, %v717, %v917
    %vm934 = vcmp.lt.s32.totalorder %v719, %v919
    %v935 = vsel %vm934, %v719, %v919
    %vm936 = vcmp.lt.s32.totalorder %v721, %v921
    %v937 = vsel %vm936, %v721, %v921
    %v938 = vrcp.pop %v794
    %v939 = vrcp.pop %v795
    %v940 = vrcp.pop %v796
    %v941 = vrcp.pop %v797
    %v942 = vrcp.pop %v798
    %v943 = vrcp.pop %v799
    %v944 = vrcp.pop %v800
    %v945 = vrcp.pop %v801
    %v954 = vlaneseq
    %v955 = vshrl.u32 %v954, 7
    %v956 = vsub.s32 0, %v955
    %v957 = vrot.slane %v938, %v956
    %v958 = vlaneseq
    %v959 = vshrl.u32 %v958, 7
    %v960 = vsub.s32 4, %v959
    %v961 = vrot.slane %v938, %v960
    %v962 = vlaneseq
    %v963 = vshrl.u32 %v962, 7
    %v964 = vsub.s32 0, %v963
    %v965 = vrot.slane %v939, %v964
    %v966 = vlaneseq
    %v967 = vshrl.u32 %v966, 7
    %v968 = vsub.s32 4, %v967
    %v969 = vrot.slane %v939, %v968
    %v970 = vlaneseq
    %v971 = vshrl.u32 %v970, 7
    %v972 = vsub.s32 0, %v971
    %v973 = vrot.slane %v940, %v972
    %v974 = vlaneseq
    %v975 = vshrl.u32 %v974, 7
    %v976 = vsub.s32 4, %v975
    %v977 = vrot.slane %v940, %v976
    %v978 = vlaneseq
    %v979 = vshrl.u32 %v978, 7
    %v980 = vsub.s32 0, %v979
    %v981 = vrot.slane %v941, %v980
    %v982 = vlaneseq
    %v983 = vshrl.u32 %v982, 7
    %v984 = vsub.s32 4, %v983
    %v985 = vrot.slane %v941, %v984
    %v986 = vlaneseq
    %v987 = vshrl.u32 %v986, 7
    %v988 = vsub.s32 0, %v987
    %v989 = vrot.slane %v942, %v988
    %v990 = vlaneseq
    %v991 = vshrl.u32 %v990, 7
    %v992 = vsub.s32 4, %v991
    %v993 = vrot.slane %v942, %v992
    %v994 = vlaneseq
    %v995 = vshrl.u32 %v994, 7
    %v996 = vsub.s32 0, %v995
    %v997 = vrot.slane %v943, %v996
    %v998 = vlaneseq
    %v999 = vshrl.u32 %v998, 7
    %v1000 = vsub.s32 4, %v999
    %v1001 = vrot.slane %v943, %v1000
    %v1002 = vlaneseq
    %v1003 = vshrl.u32 %v1002, 7
    %v1004 = vsub.s32 0, %v1003
    %v1005 = vrot.slane %v944, %v1004
    %v1006 = vlaneseq
    %v1007 = vshrl.u32 %v1006, 7
    %v1008 = vsub.s32 4, %v1007
    %v1009 = vrot.slane %v944, %v1008
    %v1010 = vlaneseq
    %v1011 = vshrl.u32 %v1010, 7
    %v1012 = vsub.s32 0, %v1011
    %v1013 = vrot.slane %v945, %v1012
    %v1014 = vlaneseq
    %v1015 = vshrl.u32 %v1014, 7
    %v1016 = vsub.s32 4, %v1015
    %v1017 = vrot.slane %v945, %v1016
    %v1018 = vsel %vm453, %v965, %v957
    %v1019 = vsel %vm455, %v973, %v1018
    %v1020 = vsel %vm457, %v981, %v1019
    %v1021 = vsel %vm459, %v989, %v1020
    %v1022 = vsel %vm461, %v997, %v1021
    %v1023 = vsel %vm463, %v1005, %v1022
    %v1024 = vsel %vm465, %v1013, %v1023
    %v1025 = vsel %vm453, %v969, %v961
    %v1026 = vsel %vm455, %v977, %v1025
    %v1027 = vsel %vm457, %v985, %v1026
    %v1028 = vsel %vm459, %v993, %v1027
    %v1029 = vsel %vm461, %v1001, %v1028
    %v1030 = vsel %vm463, %v1009, %v1029
    %v1031 = vsel %vm465, %v1017, %v1030
    %v1034 = vmul.f32 %v888, %v1024
    %v1035 = vmul.f32 %v889, %v1031
    %v1036 = vadd.f32 %v884, %v888
    %v1037 = vadd.f32 %v885, %v889
    %v1038 = vmul.f32 %v1036, %v1024
    %v1039 = vmul.f32 %v1037, %v1031
    %v1040 = vsub.f32 1.0, %v1038
    %v1041 = vsub.f32 1.0, %v1039
    %v1042 = vmax.f32 %v1040, 0.0
    %v1043 = vmax.f32 %v1041, 0.0
    %vm1044 = vcmp.gt.s32.totalorder %v176, 0
    %vm1045 = vcmp.gt.s32.totalorder %v177, 0
    %v1046 = vsel %vm1044, 1.0, 0.1
    %v1047 = vsel %vm1045, 1.0, 0.1
    %v1048 = vlog2.pop %v1038
    %v1049 = vmul.f32 %v1048, 0.6931472
    %v1050 = vlog2.pop %v1039
    %v1051 = vmul.f32 %v1050, 0.6931472
    %v1052 = vsub.f32 0.0, %v1049
    %v1053 = vsub.f32 0.0, %v1051
    %v1054 = vmul.f32 %v1042, %v1042
    %v1055 = vmul.f32 %v1043, %v1043
    %v1056 = vmul.f32 %v1052, %v1054
    %v1057 = vmul.f32 %v1053, %v1055
    %v1058 = vmul.f32 %v1056, %v1046
    %v1059 = vmul.f32 %v1057, %v1047
    %vm1060 = vcmp.ge.s32.totalorder %v174, 0
    %vm1061 = vcmp.ge.s32.totalorder %v175, 0
    %vm1062 = vcmp.ge.s32.totalorder %v176, 0
    %vm1063 = vcmp.ge.s32.totalorder %v177, 0
    %vm1064 = vmand %vm1060, %vm1062
    %vm1065 = vmand %vm1061, %vm1063
    %v1066 = vmul.f32 %v884, %v1024
    %v1067 = vmul.f32 %v885, %v1031
    %v1068 = vsel %vm1064, %v1066, 1.0
    %v1069 = vsel %vm1065, %v1067, 1.0
    %v1070 = vsub.f32 1.0, %v1068
    %v1071 = vsub.f32 1.0, %v1069
    %v1072 = vmax.f32 %v1070, 0.0
    %v1073 = vmax.f32 %v1071, 0.0
    %v1074 = vlog2.pop %v1068
    %v1075 = vmul.f32 %v1074, 0.6931472
    %v1076 = vlog2.pop %v1069
    %v1077 = vmul.f32 %v1076, 0.6931472
    %v1078 = vsub.f32 0.0, %v1075
    %v1079 = vsub.f32 0.0, %v1077
    %v1080 = vmul.f32 %v1072, %v1072
    %v1081 = vmul.f32 %v1073, %v1073
    %v1082 = vmul.f32 %v1078, %v1080
    %v1083 = vmul.f32 %v1079, %v1081
    %vm1084 = vcmp.lt.s32.totalorder %v174, 0
    %vm1085 = vcmp.lt.s32.totalorder %v175, 0
    %vm1086 = vmand %vm1084, %vm1044
    %vm1087 = vmand %vm1085, %vm1045
    %v1088 = vsel %vm1086, 1, 0
    %v1089 = vsel %vm1087, 1, 0
    %v1090 = vcvt.s32.f32 %v1088
    %v1091 = vcvt.s32.f32 %v1089
    %v1092 = vsub.f32 %v158, %v166
    %v1093 = vsub.f32 %v159, %v167
    %v1094 = vsub.f32 %v160, %v168
    %v1095 = vsub.f32 %v161, %v169
    %v1096 = vsub.f32 %v162, %v170
    %v1097 = vsub.f32 %v163, %v171
    %v1098 = vsub.f32 %v164, %v172
    %v1099 = vsub.f32 %v165, %v173
    %v1100 = vmul.f32 %v1092, %v1092
    %v1101 = vmul.f32 %v1093, %v1093
    %v1102 = vmul.f32 %v1094, %v1094
    %v1103 = vmul.f32 %v1095, %v1095
    %v1104 = vmul.f32 %v1096, %v1096
    %v1105 = vmul.f32 %v1097, %v1097
    %v1106 = vmul.f32 %v1098, %v1098
    %v1107 = vmul.f32 %v1099, %v1099
    %v1116 = vcombine.high %v1100, %v1100
    %v1117 = vcombine.high %v1101, %v1101
    %v1118 = vcombine.high %v1102, %v1102
    %v1119 = vcombine.high %v1103, %v1103
    %v1120 = vcombine.high %v1104, %v1104
    %v1121 = vcombine.high %v1105, %v1105
    %v1122 = vcombine.high %v1106, %v1106
    %v1123 = vcombine.high %v1107, %v1107
    %vm1132 = vcmask 1043456
    %v1133 = vsel %vm1132, %v1100, 0.0
    %v1134 = vrot.slane %v1133, 4
    %v1135 = vadd.f32 %v1133, %v1134
    %v1136 = vrot.slane %v1135, 2
    %v1137 = vadd.f32 %v1135, %v1136
    %v1138 = vrot.slane %v1137, 1
    %v1139 = vadd.f32 %v1137, %v1138
    %v1140 = vsel %vm1132, %v1116, 0.0
    %v1141 = vrot.slane %v1140, 4
    %v1142 = vadd.f32 %v1140, %v1141
    %v1143 = vrot.slane %v1142, 2
    %v1144 = vadd.f32 %v1142, %v1143
    %v1145 = vrot.slane %v1144, 1
    %v1146 = vadd.f32 %v1144, %v1145
    %v1147 = vsel %vm1132, %v1101, 0.0
    %v1148 = vrot.slane %v1147, 4
    %v1149 = vadd.f32 %v1147, %v1148
    %v1150 = vrot.slane %v1149, 2
    %v1151 = vadd.f32 %v1149, %v1150
    %v1152 = vrot.slane %v1151, 1
    %v1153 = vadd.f32 %v1151, %v1152
    %v1154 = vsel %vm1132, %v1117, 0.0
    %v1155 = vrot.slane %v1154, 4
    %v1156 = vadd.f32 %v1154, %v1155
    %v1157 = vrot.slane %v1156, 2
    %v1158 = vadd.f32 %v1156, %v1157
    %v1159 = vrot.slane %v1158, 1
    %v1160 = vadd.f32 %v1158, %v1159
    %v1161 = vsel %vm1132, %v1102, 0.0
    %v1162 = vrot.slane %v1161, 4
    %v1163 = vadd.f32 %v1161, %v1162
    %v1164 = vrot.slane %v1163, 2
    %v1165 = vadd.f32 %v1163, %v1164
    %v1166 = vrot.slane %v1165, 1
    %v1167 = vadd.f32 %v1165, %v1166
    %v1168 = vsel %vm1132, %v1118, 0.0
    %v1169 = vrot.slane %v1168, 4
    %v1170 = vadd.f32 %v1168, %v1169
    %v1171 = vrot.slane %v1170, 2
    %v1172 = vadd.f32 %v1170, %v1171
    %v1173 = vrot.slane %v1172, 1
    %v1174 = vadd.f32 %v1172, %v1173
    %v1175 = vsel %vm1132, %v1103, 0.0
    %v1176 = vrot.slane %v1175, 4
    %v1177 = vadd.f32 %v1175, %v1176
    %v1178 = vrot.slane %v1177, 2
    %v1179 = vadd.f32 %v1177, %v1178
    %v1180 = vrot.slane %v1179, 1
    %v1181 = vadd.f32 %v1179, %v1180
    %v1182 = vsel %vm1132, %v1119, 0.0
    %v1183 = vrot.slane %v1182, 4
    %v1184 = vadd.f32 %v1182, %v1183
    %v1185 = vrot.slane %v1184, 2
    %v1186 = vadd.f32 %v1184, %v1185
    %v1187 = vrot.slane %v1186, 1
    %v1188 = vadd.f32 %v1186, %v1187
    %v1189 = vsel %vm1132, %v1104, 0.0
    %v1190 = vrot.slane %v1189, 4
    %v1191 = vadd.f32 %v1189, %v1190
    %v1192 = vrot.slane %v1191, 2
    %v1193 = vadd.f32 %v1191, %v1192
    %v1194 = vrot.slane %v1193, 1
    %v1195 = vadd.f32 %v1193, %v1194
    %v1196 = vsel %vm1132, %v1120, 0.0
    %v1197 = vrot.slane %v1196, 4
    %v1198 = vadd.f32 %v1196, %v1197
    %v1199 = vrot.slane %v1198, 2
    %v1200 = vadd.f32 %v1198, %v1199
    %v1201 = vrot.slane %v1200, 1
    %v1202 = vadd.f32 %v1200, %v1201
    %v1203 = vsel %vm1132, %v1105, 0.0
    %v1204 = vrot.slane %v1203, 4
    %v1205 = vadd.f32 %v1203, %v1204
    %v1206 = vrot.slane %v1205, 2
    %v1207 = vadd.f32 %v1205, %v1206
    %v1208 = vrot.slane %v1207, 1
    %v1209 = vadd.f32 %v1207, %v1208
    %v1210 = vsel %vm1132, %v1121, 0.0
    %v1211 = vrot.slane %v1210, 4
    %v1212 = vadd.f32 %v1210, %v1211
    %v1213 = vrot.slane %v1212, 2
    %v1214 = vadd.f32 %v1212, %v1213
    %v1215 = vrot.slane %v1214, 1
    %v1216 = vadd.f32 %v1214, %v1215
    %v1217 = vsel %vm1132, %v1106, 0.0
    %v1218 = vrot.slane %v1217, 4
    %v1219 = vadd.f32 %v1217, %v1218
    %v1220 = vrot.slane %v1219, 2
    %v1221 = vadd.f32 %v1219, %v1220
    %v1222 = vrot.slane %v1221, 1
    %v1223 = vadd.f32 %v1221, %v1222
    %v1224 = vsel %vm1132, %v1122, 0.0
    %v1225 = vrot.slane %v1224, 4
    %v1226 = vadd.f32 %v1224, %v1225
    %v1227 = vrot.slane %v1226, 2
    %v1228 = vadd.f32 %v1226, %v1227
    %v1229 = vrot.slane %v1228, 1
    %v1230 = vadd.f32 %v1228, %v1229
    %v1231 = vsel %vm1132, %v1107, 0.0
    %v1232 = vrot.slane %v1231, 4
    %v1233 = vadd.f32 %v1231, %v1232
    %v1234 = vrot.slane %v1233, 2
    %v1235 = vadd.f32 %v1233, %v1234
    %v1236 = vrot.slane %v1235, 1
    %v1237 = vadd.f32 %v1235, %v1236
    %v1238 = vsel %vm1132, %v1123, 0.0
    %v1239 = vrot.slane %v1238, 4
    %v1240 = vadd.f32 %v1238, %v1239
    %v1241 = vrot.slane %v1240, 2
    %v1242 = vadd.f32 %v1240, %v1241
    %v1243 = vrot.slane %v1242, 1
    %v1244 = vadd.f32 %v1242, %v1243
    %v1245 = vmax.f32 %v1034, %v1090
    %v1246 = vmax.f32 %v1035, %v1091
    %v1247 = vcombine.low %v176, %v177
    %v1248 = vcombine.high %v176, %v177
    %v1249 = vrot.slane %v1247, 1
    %v1250 = vrot.slane %v1247, 2
    %v1251 = vrot.slane %v1247, 3
    %v1252 = vrot.slane %v1248, 1
    %v1253 = vrot.slane %v1248, 2
    %v1254 = vrot.slane %v1248, 3
    %vm1255 = vcmp.eq.s32.totalorder %v923, %v1247
    %vm1256 = vcmp.eq.s32.totalorder %v925, %v1249
    %vm1257 = vcmp.eq.s32.totalorder %v927, %v1250
    %vm1258 = vcmp.eq.s32.totalorder %v929, %v1251
    %vm1259 = vcmp.eq.s32.totalorder %v931, %v1248
    %vm1260 = vcmp.eq.s32.totalorder %v933, %v1252
    %vm1261 = vcmp.eq.s32.totalorder %v935, %v1253
    %vm1262 = vcmp.eq.s32.totalorder %v937, %v1254
    %v1263 = vsel %vm1255, 1, 0
    %v1264 = vsel %vm1256, 1, 0
    %v1265 = vsel %vm1257, 1, 0
    %v1266 = vsel %vm1258, 1, 0
    %v1267 = vsel %vm1259, 1, 0
    %v1268 = vsel %vm1260, 1, 0
    %v1269 = vsel %vm1261, 1, 0
    %v1270 = vsel %vm1262, 1, 0
    %v1271 = vlaneseq
    %v1272 = vshrl.u32 %v1271, 7
    %v1273 = vsub.s32 0, %v1272
    %v1274 = vrot.slane %v1263, %v1273
    %v1275 = vlaneseq
    %v1276 = vshrl.u32 %v1275, 7
    %v1277 = vsub.s32 4, %v1276
    %v1278 = vrot.slane %v1263, %v1277
    %v1279 = vlaneseq
    %v1280 = vshrl.u32 %v1279, 7
    %v1281 = vsub.s32 0, %v1280
    %v1282 = vrot.slane %v1264, %v1281
    %v1283 = vlaneseq
    %v1284 = vshrl.u32 %v1283, 7
    %v1285 = vsub.s32 4, %v1284
    %v1286 = vrot.slane %v1264, %v1285
    %v1287 = vlaneseq
    %v1288 = vshrl.u32 %v1287, 7
    %v1289 = vsub.s32 0, %v1288
    %v1290 = vrot.slane %v1265, %v1289
    %v1291 = vlaneseq
    %v1292 = vshrl.u32 %v1291, 7
    %v1293 = vsub.s32 4, %v1292
    %v1294 = vrot.slane %v1265, %v1293
    %v1295 = vlaneseq
    %v1296 = vshrl.u32 %v1295, 7
    %v1297 = vsub.s32 0, %v1296
    %v1298 = vrot.slane %v1266, %v1297
    %v1299 = vlaneseq
    %v1300 = vshrl.u32 %v1299, 7
    %v1301 = vsub.s32 4, %v1300
    %v1302 = vrot.slane %v1266, %v1301
    %v1303 = vlaneseq
    %v1304 = vshrl.u32 %v1303, 7
    %v1305 = vsub.s32 0, %v1304
    %v1306 = vrot.slane %v1267, %v1305
    %v1307 = vlaneseq
    %v1308 = vshrl.u32 %v1307, 7
    %v1309 = vsub.s32 4, %v1308
    %v1310 = vrot.slane %v1267, %v1309
    %v1311 = vlaneseq
    %v1312 = vshrl.u32 %v1311, 7
    %v1313 = vsub.s32 0, %v1312
    %v1314 = vrot.slane %v1268, %v1313
    %v1315 = vlaneseq
    %v1316 = vshrl.u32 %v1315, 7
    %v1317 = vsub.s32 4, %v1316
    %v1318 = vrot.slane %v1268, %v1317
    %v1319 = vlaneseq
    %v1320 = vshrl.u32 %v1319, 7
    %v1321 = vsub.s32 0, %v1320
    %v1322 = vrot.slane %v1269, %v1321
    %v1323 = vlaneseq
    %v1324 = vshrl.u32 %v1323, 7
    %v1325 = vsub.s32 4, %v1324
    %v1326 = vrot.slane %v1269, %v1325
    %v1327 = vlaneseq
    %v1328 = vshrl.u32 %v1327, 7
    %v1329 = vsub.s32 0, %v1328
    %v1330 = vrot.slane %v1270, %v1329
    %v1331 = vlaneseq
    %v1332 = vshrl.u32 %v1331, 7
    %v1333 = vsub.s32 4, %v1332
    %v1334 = vrot.slane %v1270, %v1333
    %v1335 = vsel %vm453, %v1282, %v1274
    %v1336 = vsel %vm455, %v1290, %v1335
    %v1337 = vsel %vm457, %v1298, %v1336
    %v1338 = vsel %vm459, %v1306, %v1337
    %v1339 = vsel %vm461, %v1314, %v1338
    %v1340 = vsel %vm463, %v1322, %v1339
    %v1341 = vsel %vm465, %v1330, %v1340
    %v1342 = vsel %vm453, %v1286, %v1278
    %v1343 = vsel %vm455, %v1294, %v1342
    %v1344 = vsel %vm457, %v1302, %v1343
    %v1345 = vsel %vm459, %v1310, %v1344
    %v1346 = vsel %vm461, %v1318, %v1345
    %v1347 = vsel %vm463, %v1326, %v1346
    %v1348 = vsel %vm465, %v1334, %v1347
    %vm1349 = vcmp.ne.s32.totalorder %v1341, 0
    %vm1350 = vcmp.ne.s32.totalorder %v1348, 0
    %vm1351 = vmand %vm1086, %vm1349
    %vm1352 = vmand %vm1087, %vm1350
    %v1353 = vsel %vm1351, 1.0, 0.0
    %v1354 = vsel %vm1352, 1.0, 0.0
    %vm1355 = vcmp.ne.s32.totalorder %v923, 0
    %vm1356 = vcmp.ne.s32.totalorder %v925, 0
    %vm1357 = vcmp.ne.s32.totalorder %v927, 0
    %vm1358 = vcmp.ne.s32.totalorder %v929, 0
    %vm1359 = vcmp.ne.s32.totalorder %v931, 0
    %vm1360 = vcmp.ne.s32.totalorder %v933, 0
    %vm1361 = vcmp.ne.s32.totalorder %v935, 0
    %vm1362 = vcmp.ne.s32.totalorder %v937, 0
    %vm1363 = vcmp.ne.s32.totalorder %v923, %v1247
    %vm1364 = vcmp.ne.s32.totalorder %v925, %v1249
    %vm1365 = vcmp.ne.s32.totalorder %v927, %v1250
    %vm1366 = vcmp.ne.s32.totalorder %v929, %v1251
    %vm1367 = vcmp.ne.s32.totalorder %v931, %v1248
    %vm1368 = vcmp.ne.s32.totalorder %v933, %v1252
    %vm1369 = vcmp.ne.s32.totalorder %v935, %v1253
    %vm1370 = vcmp.ne.s32.totalorder %v937, %v1254
    %vm1371 = vmand %vm1355, %vm1363
    %vm1372 = vmand %vm1356, %vm1364
    %vm1373 = vmand %vm1357, %vm1365
    %vm1374 = vmand %vm1358, %vm1366
    %vm1375 = vmand %vm1359, %vm1367
    %vm1376 = vmand %vm1360, %vm1368
    %vm1377 = vmand %vm1361, %vm1369
    %vm1378 = vmand %vm1362, %vm1370
    %v1379 = vsel %vm1371, 1, 0
    %v1380 = vsel %vm1372, 1, 0
    %v1381 = vsel %vm1373, 1, 0
    %v1382 = vsel %vm1374, 1, 0
    %v1383 = vsel %vm1375, 1, 0
    %v1384 = vsel %vm1376, 1, 0
    %v1385 = vsel %vm1377, 1, 0
    %v1386 = vsel %vm1378, 1, 0
    %v1387 = vcvt.s32.f32 %v1379
    %v1388 = vcvt.s32.f32 %v1380
    %v1389 = vcvt.s32.f32 %v1381
    %v1390 = vcvt.s32.f32 %v1382
    %v1391 = vcvt.s32.f32 %v1383
    %v1392 = vcvt.s32.f32 %v1384
    %v1393 = vcvt.s32.f32 %v1385
    %v1394 = vcvt.s32.f32 %v1386
    %s1395 = sadd.s32 0, 0
    %s1396 = smul.u32 %s1395, 8
    %v1397 = vlaneseq
    %v1398 = vshrl.u32 %v1397, 7
    %v1399 = vstv %s1396
    %v1400 = vadd.s32 %v1399, %v1398
    %vm1401 = vcmp.lt.s32.totalorder %v1400, 4
    %v1402 = vsel %vm1401, 1, 0
    %v1403 = vcvt.s32.f32 %v1402
    %v1404 = vmul.f32 %v1058, %v1403
    %v1405 = vmul.f32 %v1059, %v1403
    %v1406 = vmul.f32 %v1082, %v1403
    %v1407 = vmul.f32 %v1083, %v1403
    %v1408 = vmul.f32 %v1245, %v1403
    %v1409 = vmul.f32 %v1246, %v1403
    %v1410 = vmul.f32 %v1353, %v1403
    %v1411 = vmul.f32 %v1354, %v1403
    %v1412 = vmul.f32 %v1090, %v1403
    %v1413 = vmul.f32 %v1091, %v1403
    %v1416 = vunpack.c.l.s4 839922192
    %v1417 = vunpack.c.0.s8 %v1416
    %v1418 = vlaneseq
    %v1419 = vshrl.u32 %v1418, 7
    %v1420 = vsub.s32 %v1417, %v1419
    %v1421 = vrot.slane %v1403, %v1420
    %v1423 = vunpack.c.l.s4 1985246804
    %v1424 = vunpack.c.0.s8 %v1423
    %v1425 = vlaneseq
    %v1426 = vshrl.u32 %v1425, 7
    %v1427 = vsub.s32 %v1424, %v1426
    %v1428 = vrot.slane %v1403, %v1427
    %v1429 = vrot.slane %v1421, 1
    %v1430 = vrot.slane %v1421, 2
    %v1431 = vrot.slane %v1421, 3
    %v1432 = vrot.slane %v1428, 1
    %v1433 = vrot.slane %v1428, 2
    %v1434 = vrot.slane %v1428, 3
    %v1443 = vmul.f32 %v1387, %v1421
    %v1444 = vmul.f32 %v1388, %v1429
    %v1445 = vmul.f32 %v1389, %v1430
    %v1446 = vmul.f32 %v1390, %v1431
    %v1447 = vmul.f32 %v1391, %v1428
    %v1448 = vmul.f32 %v1392, %v1432
    %v1449 = vmul.f32 %v1393, %v1433
    %v1450 = vmul.f32 %v1394, %v1434
    %v1453 = vrot.slane %v1408, 1
    %v1454 = vrot.slane %v1409, 1
    %v1455 = vrot.slane %v1408, 2
    %v1456 = vrot.slane %v1409, 2
    %v1457 = vrot.slane %v1408, 3
    %v1458 = vrot.slane %v1409, 3
    %v1459 = vrot.slane %v1408, 4
    %v1460 = vrot.slane %v1409, 4
    %v1461 = vrot.slane %v1408, 5
    %v1462 = vrot.slane %v1409, 5
    %v1463 = vrot.slane %v1408, 6
    %v1464 = vrot.slane %v1409, 6
    %v1465 = vrot.slane %v1408, 7
    %v1466 = vrot.slane %v1409, 7
    %v1483 = vmul.f32 %v1139, %v1408
    %v1484 = vmul.f32 %v1146, %v1409
    %v1485 = vmul.f32 %v1153, %v1453
    %v1486 = vmul.f32 %v1160, %v1454
    %v1487 = vmul.f32 %v1167, %v1455
    %v1488 = vmul.f32 %v1174, %v1456
    %v1489 = vmul.f32 %v1181, %v1457
    %v1490 = vmul.f32 %v1188, %v1458
    %v1491 = vmul.f32 %v1195, %v1459
    %v1492 = vmul.f32 %v1202, %v1460
    %v1493 = vmul.f32 %v1209, %v1461
    %v1494 = vmul.f32 %v1216, %v1462
    %v1495 = vmul.f32 %v1223, %v1463
    %v1496 = vmul.f32 %v1230, %v1464
    %v1497 = vmul.f32 %v1237, %v1465
    %v1498 = vmul.f32 %v1244, %v1466
    %v1499 = vld [vmem:[#allocation2] sm:$0xff]
    %v1500 = vld [vmem:[#allocation2 + $0x8] sm:$0xff]
    %v1501 = vadd.f32 %v1499, %v1404
    %v1502 = vadd.f32 %v1500, %v1405
    %1503 = vst [vmem:[#allocation2] sm:$0xff] %v1501
    %1504 = vst [vmem:[#allocation2 + $0x8] sm:$0xff] %v1502
    %s1505 = scalar_lea.vmem [#allocation2], 16
    %v1506 = vld [vmem:[%s1505] sm:$0xff]
    %v1507 = vld [vmem:[%s1505 + $0x8] sm:$0xff]
    %v1508 = vadd.f32 %v1506, %v1406
    %v1509 = vadd.f32 %v1507, %v1407
    %1510 = vst [vmem:[%s1505] sm:$0xff] %v1508
    %1511 = vst [vmem:[%s1505 + $0x8] sm:$0xff] %v1509
    %s1512 = scalar_lea.vmem [#allocation2], 32
    %v1513 = vld [vmem:[%s1512] sm:$0xff]
    %v1514 = vld [vmem:[%s1512 + $0x8] sm:$0xff]
    %v1531 = vrot.slane %v1485, 7
    %v1532 = vsel %vm453, %v1531, %v1483
    %v1533 = vrot.slane %v1487, 6
    %v1534 = vsel %vm455, %v1533, %v1532
    %v1535 = vrot.slane %v1489, 5
    %v1536 = vsel %vm457, %v1535, %v1534
    %v1537 = vrot.slane %v1491, 4
    %v1538 = vsel %vm459, %v1537, %v1536
    %v1539 = vrot.slane %v1493, 3
    %v1540 = vsel %vm461, %v1539, %v1538
    %v1541 = vrot.slane %v1495, 2
    %v1542 = vsel %vm463, %v1541, %v1540
    %v1543 = vrot.slane %v1497, 1
    %v1544 = vsel %vm465, %v1543, %v1542
    %v1545 = vrot.slane %v1486, 7
    %v1546 = vsel %vm453, %v1545, %v1484
    %v1547 = vrot.slane %v1488, 6
    %v1548 = vsel %vm455, %v1547, %v1546
    %v1549 = vrot.slane %v1490, 5
    %v1550 = vsel %vm457, %v1549, %v1548
    %v1551 = vrot.slane %v1492, 4
    %v1552 = vsel %vm459, %v1551, %v1550
    %v1553 = vrot.slane %v1494, 3
    %v1554 = vsel %vm461, %v1553, %v1552
    %v1555 = vrot.slane %v1496, 2
    %v1556 = vsel %vm463, %v1555, %v1554
    %v1557 = vrot.slane %v1498, 1
    %v1558 = vsel %vm465, %v1557, %v1556
    %v1561 = vadd.f32 %v1513, %v1544
    %v1562 = vadd.f32 %v1514, %v1558
    %1563 = vst [vmem:[%s1512] sm:$0xff] %v1561
    %1564 = vst [vmem:[%s1512 + $0x8] sm:$0xff] %v1562
    %s1565 = scalar_lea.vmem [#allocation2], 48
    %v1566 = vld [vmem:[%s1565] sm:$0xff]
    %v1567 = vld [vmem:[%s1565 + $0x8] sm:$0xff]
    %v1568 = vadd.f32 %v1566, %v1408
    %v1569 = vadd.f32 %v1567, %v1409
    %1570 = vst [vmem:[%s1565] sm:$0xff] %v1568
    %1571 = vst [vmem:[%s1565 + $0x8] sm:$0xff] %v1569
    %s1572 = scalar_lea.vmem [#allocation2], 64
    %v1573 = vld [vmem:[%s1572] sm:$0xff]
    %v1574 = vld [vmem:[%s1572 + $0x8] sm:$0xff]
    %v1575 = vadd.f32 %v1573, %v1410
    %v1576 = vadd.f32 %v1574, %v1411
    %1577 = vst [vmem:[%s1572] sm:$0xff] %v1575
    %1578 = vst [vmem:[%s1572 + $0x8] sm:$0xff] %v1576
    %s1579 = scalar_lea.vmem [#allocation2], 80
    %v1580 = vld [vmem:[%s1579] sm:$0xff]
    %v1581 = vld [vmem:[%s1579 + $0x8] sm:$0xff]
    %v1582 = vadd.f32 %v1580, %v1412
    %v1583 = vadd.f32 %v1581, %v1413
    %1584 = vst [vmem:[%s1579] sm:$0xff] %v1582
    %1585 = vst [vmem:[%s1579 + $0x8] sm:$0xff] %v1583
    %s1586 = scalar_lea.vmem [#allocation2], 96
    %v1587 = vld [vmem:[%s1586] sm:$0xff]
    %v1588 = vld [vmem:[%s1586 + $0x8] sm:$0xff]
    %v1597 = vlaneseq
    %v1598 = vshrl.u32 %v1597, 7
    %v1599 = vsub.s32 0, %v1598
    %v1600 = vrot.slane %v1443, %v1599
    %v1601 = vlaneseq
    %v1602 = vshrl.u32 %v1601, 7
    %v1603 = vsub.s32 4, %v1602
    %v1604 = vrot.slane %v1443, %v1603
    %v1605 = vlaneseq
    %v1606 = vshrl.u32 %v1605, 7
    %v1607 = vsub.s32 0, %v1606
    %v1608 = vrot.slane %v1444, %v1607
    %v1609 = vlaneseq
    %v1610 = vshrl.u32 %v1609, 7
    %v1611 = vsub.s32 4, %v1610
    %v1612 = vrot.slane %v1444, %v1611
    %v1613 = vlaneseq
    %v1614 = vshrl.u32 %v1613, 7
    %v1615 = vsub.s32 0, %v1614
    %v1616 = vrot.slane %v1445, %v1615
    %v1617 = vlaneseq
    %v1618 = vshrl.u32 %v1617, 7
    %v1619 = vsub.s32 4, %v1618
    %v1620 = vrot.slane %v1445, %v1619
    %v1621 = vlaneseq
    %v1622 = vshrl.u32 %v1621, 7
    %v1623 = vsub.s32 0, %v1622
    %v1624 = vrot.slane %v1446, %v1623
    %v1625 = vlaneseq
    %v1626 = vshrl.u32 %v1625, 7
    %v1627 = vsub.s32 4, %v1626
    %v1628 = vrot.slane %v1446, %v1627
    %v1629 = vlaneseq
    %v1630 = vshrl.u32 %v1629, 7
    %v1631 = vsub.s32 0, %v1630
    %v1632 = vrot.slane %v1447, %v1631
    %v1633 = vlaneseq
    %v1634 = vshrl.u32 %v1633, 7
    %v1635 = vsub.s32 4, %v1634
    %v1636 = vrot.slane %v1447, %v1635
    %v1637 = vlaneseq
    %v1638 = vshrl.u32 %v1637, 7
    %v1639 = vsub.s32 0, %v1638
    %v1640 = vrot.slane %v1448, %v1639
    %v1641 = vlaneseq
    %v1642 = vshrl.u32 %v1641, 7
    %v1643 = vsub.s32 4, %v1642
    %v1644 = vrot.slane %v1448, %v1643
    %v1645 = vlaneseq
    %v1646 = vshrl.u32 %v1645, 7
    %v1647 = vsub.s32 0, %v1646
    %v1648 = vrot.slane %v1449, %v1647
    %v1649 = vlaneseq
    %v1650 = vshrl.u32 %v1649, 7
    %v1651 = vsub.s32 4, %v1650
    %v1652 = vrot.slane %v1449, %v1651
    %v1653 = vlaneseq
    %v1654 = vshrl.u32 %v1653, 7
    %v1655 = vsub.s32 0, %v1654
    %v1656 = vrot.slane %v1450, %v1655
    %v1657 = vlaneseq
    %v1658 = vshrl.u32 %v1657, 7
    %v1659 = vsub.s32 4, %v1658
    %v1660 = vrot.slane %v1450, %v1659
    %v1661 = vsel %vm453, %v1608, %v1600
    %v1662 = vsel %vm455, %v1616, %v1661
    %v1663 = vsel %vm457, %v1624, %v1662
    %v1664 = vsel %vm459, %v1632, %v1663
    %v1665 = vsel %vm461, %v1640, %v1664
    %v1666 = vsel %vm463, %v1648, %v1665
    %v1667 = vsel %vm465, %v1656, %v1666
    %v1668 = vsel %vm453, %v1612, %v1604
    %v1669 = vsel %vm455, %v1620, %v1668
    %v1670 = vsel %vm457, %v1628, %v1669
    %v1671 = vsel %vm459, %v1636, %v1670
    %v1672 = vsel %vm461, %v1644, %v1671
    %v1673 = vsel %vm463, %v1652, %v1672
    %v1674 = vsel %vm465, %v1660, %v1673
    %v1677 = vadd.f32 %v1587, %v1667
    %v1678 = vadd.f32 %v1588, %v1674
    %1679 = vst [vmem:[%s1586] sm:$0xff] %v1677
    %1680 = vst [vmem:[%s1586 + $0x8] sm:$0xff] %v1678
    // Predicated region
    $region30: #{tpu_custom_call.1} parent=1 // pred_check
      %p1681 = pneg %p132
    $region31: #{tpu_custom_call.1} parent=1 // pred_check_branch
      %1683 = sbr.rel (%p1681) target = $region33
    $region32: #{tpu_custom_call.1} parent=1 // pred_region
      %v1684 = vld [vmem:[#allocation2] sm:$0xff]
      %v1685 = vld [vmem:[#allocation2 + $0x8] sm:$0xff]
      %v1686 = vadd.f32 %v1684, %v1685
      %1687 = vadd.xlane.f32.xlu0 %v1686
      %v1688 = vpop.xlane.xlu0 %1687
      %v1689 = vrot.slane %v1688, 4
      %v1690 = vadd.f32 %v1688, %v1689
      %v1691 = vrot.slane %v1690, 2
      %v1692 = vadd.f32 %v1690, %v1691
      %v1693 = vrot.slane %v1692, 1
      %v1694 = vadd.f32 %v1692, %v1693
      %s1695 = vtos %v1694
      %v1696 = vstv %s1695
      %1697 = vst [vmem:[#allocation6] sm:$0x1] %v1696
      %v1698 = vld [vmem:[%s1505] sm:$0xff]
      %v1699 = vld [vmem:[%s1505 + $0x8] sm:$0xff]
      %v1700 = vadd.f32 %v1698, %v1699
      %1701 = vadd.xlane.f32.xlu0 %v1700
      %v1702 = vpop.xlane.xlu0 %1701
      %v1703 = vrot.slane %v1702, 4
      %v1704 = vadd.f32 %v1702, %v1703
      %v1705 = vrot.slane %v1704, 2
      %v1706 = vadd.f32 %v1704, %v1705
      %v1707 = vrot.slane %v1706, 1
      %v1708 = vadd.f32 %v1706, %v1707
      %s1709 = vtos %v1708
      %v1710 = vstv %s1709
      %1711 = vst [vmem:[#allocation6 + $0x1] sm:$0x1] %v1710
      %v1712 = vld [vmem:[%s1512] sm:$0xff]
      %v1713 = vld [vmem:[%s1512 + $0x8] sm:$0xff]
      %v1714 = vadd.f32 %v1712, %v1713
      %1715 = vadd.xlane.f32.xlu0 %v1714
      %v1716 = vpop.xlane.xlu0 %1715
      %v1717 = vrot.slane %v1716, 4
      %v1718 = vadd.f32 %v1716, %v1717
      %v1719 = vrot.slane %v1718, 2
      %v1720 = vadd.f32 %v1718, %v1719
      %v1721 = vrot.slane %v1720, 1
      %v1722 = vadd.f32 %v1720, %v1721
      %s1723 = vtos %v1722
      %v1724 = vstv %s1723
      %1725 = vst [vmem:[#allocation6 + $0x2] sm:$0x1] %v1724
      %v1726 = vld [vmem:[%s1565] sm:$0xff]
      %v1727 = vld [vmem:[%s1565 + $0x8] sm:$0xff]
      %v1728 = vadd.f32 %v1726, %v1727
      %1729 = vadd.xlane.f32.xlu0 %v1728
      %v1730 = vpop.xlane.xlu0 %1729
      %v1731 = vrot.slane %v1730, 4
      %v1732 = vadd.f32 %v1730, %v1731
      %v1733 = vrot.slane %v1732, 2
      %v1734 = vadd.f32 %v1732, %v1733
      %v1735 = vrot.slane %v1734, 1
      %v1736 = vadd.f32 %v1734, %v1735
      %s1737 = vtos %v1736
      %v1738 = vstv %s1737
      %1739 = vst [vmem:[#allocation6 + $0x3] sm:$0x1] %v1738
      %v1740 = vld [vmem:[%s1572] sm:$0xff]
      %v1741 = vld [vmem:[%s1572 + $0x8] sm:$0xff]
      %v1742 = vadd.f32 %v1740, %v1741
      %1743 = vadd.xlane.f32.xlu0 %v1742
      %v1744 = vpop.xlane.xlu0 %1743
      %v1745 = vrot.slane %v1744, 4
      %v1746 = vadd.f32 %v1744, %v1745
      %v1747 = vrot.slane %v1746, 2
      %v1748 = vadd.f32 %v1746, %v1747
      %v1749 = vrot.slane %v1748, 1
      %v1750 = vadd.f32 %v1748, %v1749
      %s1751 = vtos %v1750
      %v1752 = vstv %s1751
      %1753 = vst [vmem:[#allocation6 + $0x4] sm:$0x1] %v1752
      %v1754 = vld [vmem:[%s1579] sm:$0xff]
      %v1755 = vld [vmem:[%s1579 + $0x8] sm:$0xff]
      %v1756 = vadd.f32 %v1754, %v1755
      %1757 = vadd.xlane.f32.xlu0 %v1756
      %v1758 = vpop.xlane.xlu0 %1757
      %v1759 = vrot.slane %v1758, 4
      %v1760 = vadd.f32 %v1758, %v1759
      %v1761 = vrot.slane %v1760, 2
      %v1762 = vadd.f32 %v1760, %v1761
      %v1763 = vrot.slane %v1762, 1
      %v1764 = vadd.f32 %v1762, %v1763
      %s1765 = vtos %v1764
      %v1766 = vstv %s1765
      %1767 = vst [vmem:[#allocation6 + $0x5] sm:$0x1] %v1766
      %v1768 = vld [vmem:[%s1586] sm:$0xff]
      %v1769 = vld [vmem:[%s1586 + $0x8] sm:$0xff]
      %v1770 = vadd.f32 %v1768, %v1769
      %1771 = vadd.xlane.f32.xlu0 %v1770
      %v1772 = vpop.xlane.xlu0 %1771
      %v1773 = vrot.slane %v1772, 4
      %v1774 = vadd.f32 %v1772, %v1773
      %v1775 = vrot.slane %v1774, 2
      %v1776 = vadd.f32 %v1774, %v1775
      %v1777 = vrot.slane %v1776, 1
      %v1778 = vadd.f32 %v1776, %v1777
      %s1779 = vtos %v1778
      %v1780 = vstv %s1779
      %1781 = vst [vmem:[#allocation6 + $0x6] sm:$0x1] %v1780
      %1782 = vst [vmem:[#allocation6 + $0x7] sm:$0x1] 0.0
    $region33: #{tpu_custom_call.1} parent=1 // pred_fallthru
      _
    // Predicated region
    $region34: #{tpu_custom_call.1} parent=1 // pred_check
      _
    $region35: #{tpu_custom_call.1} parent=1 // pred_check_branch
      %1784 = sbr.rel (0) target = $region37
    $region36: #{tpu_custom_call.1} parent=1 // pred_region
      %s1786 = ssub.s32 128, 128
      %1787 = vsyncadd [#allocation5], %s1786
      %s1789 = sshll.u32 [#allocation6], 4
      %s1790 = int_to_ptr.vmem [resolvable:$true] %s1789
      %1792 = dma.vmem_to_hbm [thread:$0]  %s1790, 128, %s5, [#allocation5]
    $region37: #{tpu_custom_call.1} parent=1 // pred_fallthru
      _
    // Predicated region
    $region38: #{tpu_custom_call.1} parent=1 // pred_check
      _
    $region39: #{tpu_custom_call.1} parent=1 // pred_check_branch
      %1794 = sbr.rel (0) target = $region41
    $region40: #{tpu_custom_call.1} parent=1 // pred_region
      %1795 = dma.done [#allocation5], 128
    $region41: #{tpu_custom_call.1} parent=1 // pred_fallthru
      _
    %1796 = vsyncpa [#allocation4], 1
    %1797 = vsyncpa [#allocation5], 1

</llo_original>
